<compile_context>
chip_gen: v6e
topology: v6e:2x2x1
jax: 0.10.0
libtpu: 0.0.40
codegen_flags: <defaults>
</compile_context>

<pallas_src>
import functools
import math

import jax
import jax.numpy as jnp
from jax import lax
from jax.experimental import pallas as pl
from jax.experimental.pallas import tpu as pltpu

D_K = 64
D_V = 64

_NEG_INIT = -1e30          # finite "minus infinity" for the running max
_MASK_FILL = -1e9          # matches torch masked_fill_(attn_mask, -1e9)


def _sdpa_flash_kernel(q_ref, k_ref, v_ref, mask_ref, o_ref,
                       q_scr, m_scr, l_scr, acc_scr,
                       *, scale, exp_dtype, precision, key_padding):
    # Blocks: q (G,TQ,Dk)  k (G,TK,Dk)  v (G,TK,Dv)
    #         mask (G,TQ,TK) or (G,1,TK) int8     out (G,TQ,Dv)
    # Scratch: q_scr (G,TQ,Dk) compute dtype; m/l (G,TQ,1) f32; acc (G,TQ,Dv) f32.
    kv = pl.program_id(2)

    @pl.when(kv == 0)
    def _():
        # Hoist the 1/sqrt(d_k) scaling: the Q block is resident across the
        # whole KV loop, so scale it once per (batch, q-block).
        q_scr[...] = q_ref[...] * scale
        m_scr[...] = jnp.full_like(m_scr, _NEG_INIT)
        l_scr[...] = jnp.zeros_like(l_scr)
        acc_scr[...] = jnp.zeros_like(acc_scr)

    # scores = (Q * scale) @ K^T : contract last dims, batch over heads
    # (no explicit transpose -> no XLU pass).
    s = lax.dot_general(
        q_scr[...], k_ref[...],
        dimension_numbers=(((2,), (2,)), ((0,), (0,))),
        preferred_element_type=jnp.float32,
        precision=precision)                                   # (G, TQ, TK) f32

    if key_padding:
        # Per-key padding mask (G,1,TK): tiny int8->f32 cast, then a single
        # broadcast add over the score tile.
        bias = mask_ref[...].astype(jnp.float32) * jnp.float32(_MASK_FILL)
        s = s + bias
    else:
        # Arbitrary dense mask: direct int8 compare (no f32 cast pass).
        s = jnp.where(mask_ref[...] != 0, jnp.float32(_MASK_FILL), s)

    # Online (streaming) softmax update; running state stays f32.
    m_prev = m_scr[...]
    m_new = jnp.maximum(m_prev, jnp.max(s, axis=-1, keepdims=True))
    alpha = jnp.exp(m_prev - m_new)                            # (G, TQ, 1)
    p = jnp.exp((s - m_new).astype(exp_dtype))                 # bf16 exp on v6e/v7x path
    l_scr[...] = alpha * l_scr[...] + jnp.sum(
        p.astype(jnp.float32), axis=-1, keepdims=True)
    acc_scr[...] = alpha * acc_scr[...] + lax.dot_general(
        p.astype(v_ref.dtype), v_ref[...],
        dimension_numbers=(((2,), (1,)), ((0,), (0,))),
        preferred_element_type=jnp.float32,
        precision=precision)                                   # (G, TQ, Dv) f32
    m_scr[...] = m_new

    @pl.when(kv == pl.num_programs(2) - 1)
    def _():
        # Exact normalization (approximate reciprocal removed for fidelity).
        o_ref[...] = (acc_scr[...] / l_scr[...]).astype(o_ref.dtype)


def _auto_block(s, preferred):
    """Largest tile: full dim if small, else a 128-multiple divisor of s."""
    if s <= preferred:
        return s
    c = (preferred // 128) * 128
    while c >= 128:
        if s % c == 0:
            return c
        c -= 128
    return s  # fall back to monolithic along this axis


def _auto_group(bh, preferred):
    g = max(1, min(bh, preferred))
    while bh % g:
        g -= 1
    return g


def scaled_dot_product_attention(Q, K, V, attn_mask, *,
                                 key_padding=False,
                                 compute_dtype=None,
                                 block_q=None, block_k=None,
                                 heads_per_step=None,
                                 vmem_limit_bytes=40 * 1024 * 1024):
    """Q, K: [B,H,S,d_k]  V: [B,H,S,d_v].

    attn_mask: bool, True = masked.
      * key_padding=False: any shape broadcastable to [B,H,S,S] (module semantics).
      * key_padding=True : per-key padding mask ([B,S], [B,1,1,S], or a full
        [B,H,S,S] padding mask whose query rows are identical) -> only O(B*S)
        mask bytes are shipped to the kernel.
    compute_dtype: e.g. jnp.bfloat16 to halve Q/K/V HBM bytes and use native
      bf16 MXU/EUP rates (accumulation stays f32; output keeps Q.dtype).
    """
    B, H, S, Dk = Q.shape
    Dv = V.shape[-1]
    BH = B * H
    scale = 1.0 / math.sqrt(Dk)                      # derived from actual head dim

    cdtype = jnp.dtype(compute_dtype) if compute_dtype is not None else jnp.dtype(Q.dtype)
    is_bf16 = cdtype == jnp.dtype(jnp.bfloat16)
    exp_dtype = jnp.bfloat16 if is_bf16 else jnp.float32
    precision = lax.Precision.DEFAULT if is_bf16 else lax.Precision.HIGHEST

    q = Q.reshape(BH, S, Dk).astype(cdtype)
    k = K.reshape(BH, S, Dk).astype(cdtype)
    v = V.reshape(BH, S, Dv).astype(cdtype)

    if key_padding:
        km = attn_mask
        if km.ndim == 2:                              # [B, S]
            km = km[:, None, None, :]
        elif km.ndim == 3:                            # [B, 1_or_S, S]
            km = km[:, None, :, :]
        if km.shape[-2] != 1:                         # collapse (constant) query axis
            km = km[..., :1, :]
        m = (jnp.broadcast_to(km, (B, H, 1, S))
             .reshape(BH, 1, S).astype(jnp.int8))     # O(B*H*S) bytes only
    else:
        am = attn_mask
        if am.ndim == 3:
            am = am[:, None, :, :]
        # int8 dense mask: 4x less HBM/VMEM traffic than int32.
        m = (jnp.broadcast_to(am, (B, H, S, S))
             .reshape(BH, S, S).astype(jnp.int8))

    tq = block_q if block_q is not None else _auto_block(S, 512)
    tk = block_k if block_k is not None else _auto_block(S, 256)
    g = heads_per_step if heads_per_step is not None else _auto_group(BH, 4)
    if heads_per_step is None and g > 1 and (BH // g) * (S // tq) < 2:
        # v7x has 2 TensorCores sharing HBM: keep >= 2 parallel grid steps.
        g = _auto_group(BH, g // 2)
    assert S % tq == 0 and S % tk == 0 and BH % g == 0, "tiles must divide dims"

    grid = (BH // g, S // tq, S // tk)

    if key_padding:
        mask_spec = pl.BlockSpec((g, 1, tk), lambda b, qi, ki: (b, 0, ki))
    else:
        mask_spec = pl.BlockSpec((g, tq, tk), lambda b, qi, ki: (b, qi, ki))

    kernel = functools.partial(
        _sdpa_flash_kernel, scale=scale, exp_dtype=exp_dtype,
        precision=precision, key_padding=key_padding)

    out = pl.pallas_call(
        kernel,
        out_shape=jax.ShapeDtypeStruct((BH, S, Dv), Q.dtype),
        grid_spec=pltpu.PrefetchScalarGridSpec(
            num_scalar_prefetch=0,
            grid=grid,
            in_specs=[
                pl.BlockSpec((g, tq, Dk), lambda b, qi, ki: (b, qi, 0)),
                pl.BlockSpec((g, tk, Dk), lambda b, qi, ki: (b, ki, 0)),
                pl.BlockSpec((g, tk, Dv), lambda b, qi, ki: (b, ki, 0)),
                mask_spec,
            ],
            out_specs=pl.BlockSpec((g, tq, Dv), lambda b, qi, ki: (b, qi, 0)),
            scratch_shapes=[
                pltpu.VMEM((g, tq, Dk), cdtype),       # hoisted scaled Q block
                pltpu.VMEM((g, tq, 1), jnp.float32),   # running max m
                pltpu.VMEM((g, tq, 1), jnp.float32),   # running denom l
                pltpu.VMEM((g, tq, Dv), jnp.float32),  # running numerator acc
            ],
        ),
        compiler_params=pltpu.CompilerParams(
            dimension_semantics=("parallel", "parallel", "arbitrary"),
            vmem_limit_bytes=vmem_limit_bytes,
        ),
    )(q, k, v, m)

    return out.reshape(B, H, S, Dv)


def _reference(Q, K, V, attn_mask):
    scores = jnp.einsum("bhqd,bhkd->bhqk", Q, K,
                        precision=lax.Precision.HIGHEST) / math.sqrt(Q.shape[-1])
    scores = jnp.where(attn_mask, _MASK_FILL, scores)
    attn = jax.nn.softmax(scores, axis=-1)
    return jnp.einsum("bhqk,bhkd->bhqd", attn, V,
                      precision=lax.Precision.HIGHEST)


if __name__ == "__main__":
    key = jax.random.PRNGKey(0)
    kq, kk, kv_, km_ = jax.random.split(key, 4)

    # --- Test 1: module semantics (arbitrary dense bool mask), f32 ----------
    B, H, S = 2, 2, 8
    Q = jax.random.normal(kq, (B, H, S, D_K), dtype=jnp.float32)
    K = jax.random.normal(kk, (B, H, S, D_K), dtype=jnp.float32)
    V = jax.random.normal(kv_, (B, H, S, D_V), dtype=jnp.float32)
    attn_mask = jax.random.bernoulli(km_, 0.25, (B, H, S, S))
    attn_mask = attn_mask.at[..., 0].set(False)   # keep every softmax row well-posed

    out = jax.block_until_ready(scaled_dot_product_attention(Q, K, V, attn_mask))
    ref = _reference(Q, K, V, attn_mask)
    assert out.shape == (B, H, S, D_V)
    # Tolerance covers MXU f32 rounding + online-softmax reordering.
    assert jnp.allclose(out, ref, atol=1e-2, rtol=1e-2), "mismatch vs reference (test 1)"

    # --- Test 2: tiled path, key-padding fast path, bf16 compute ------------
    B2, H2, S2 = 2, 4, 256
    k1, k2, k3 = jax.random.split(jax.random.PRNGKey(1), 3)
    Q2 = jax.random.normal(k1, (B2, H2, S2, D_K), dtype=jnp.float32)
    K2 = jax.random.normal(k2, (B2, H2, S2, D_K), dtype=jnp.float32)
    V2 = jax.random.normal(k3, (B2, H2, S2, D_V), dtype=jnp.float32)
    lens = jnp.array([S2 - 37, S2 - 5])
    key_pad = jnp.arange(S2)[None, :] >= lens[:, None]          # [B2, S2], True = pad

    out2 = jax.block_until_ready(scaled_dot_product_attention(
        Q2, K2, V2, key_pad, key_padding=True, compute_dtype=jnp.bfloat16,
        block_q=128, block_k=128, heads_per_step=4))
    full_mask2 = jnp.broadcast_to(key_pad[:, None, None, :], (B2, H2, S2, S2))
    ref2 = _reference(Q2, K2, V2, full_mask2)
    # bf16 Q/K/V + bf16 exp: expect ~1e-2-level deviation vs the f32 reference.
    assert jnp.allclose(out2, ref2, atol=5e-2, rtol=5e-2), "mismatch vs reference (test 2)"

    print("KERNEL_OK")
</pallas_src>

<mosaic_0001>
module attributes {stable_mosaic.version = 11 : i64} {
  func.func @_sdpa_flash_kernel(%arg0: i32, %arg1: i32, %arg2: i32, %arg3: memref<2x8x64xf32, #tpu.memory_space<vmem>>, %arg4: memref<2x8x64xf32, #tpu.memory_space<vmem>>, %arg5: memref<2x8x64xf32, #tpu.memory_space<vmem>>, %arg6: memref<2x8x8xi8, #tpu.memory_space<vmem>>, %arg7: memref<2x8x64xf32, #tpu.memory_space<vmem>>, %arg8: memref<2x8x64xf32, #tpu.memory_space<vmem>>, %arg9: memref<2x8x1xf32, #tpu.memory_space<vmem>>, %arg10: memref<2x8x1xf32, #tpu.memory_space<vmem>>, %arg11: memref<2x8x64xf32, #tpu.memory_space<vmem>>) attributes {dimension_semantics = [#tpu.dimension_semantics<parallel>, #tpu.dimension_semantics<parallel>, #tpu.dimension_semantics<arbitrary>], iteration_bounds = array<i64: 2, 1, 1>, scalar_prefetch = 0 : i64, scratch_operands = 4 : i64, tpu.core_type = #tpu.core_type<tc>, window_params = [{transform_indices = @transform_0, window_bounds = array<i64: 2, 8, 64>}, {transform_indices = @transform_1, window_bounds = array<i64: 2, 8, 64>}, {transform_indices = @transform_2, window_bounds = array<i64: 2, 8, 64>}, {transform_indices = @transform_3, window_bounds = array<i64: 2, 8, 8>}, {transform_indices = @transform_4, window_bounds = array<i64: 2, 8, 64>}]} {
    %c0_i32 = arith.constant 0 : i32
    %0 = arith.cmpi eq, %arg2, %c0_i32 : i32
    %1 = arith.extui %0 : i1 to i32
    %c0_i32_0 = arith.constant 0 : i32
    %2 = arith.cmpi ne, %1, %c0_i32_0 : i32
    scf.if %2 {
      %c0_36 = arith.constant 0 : index
      %c0_37 = arith.constant 0 : index
      %c0_38 = arith.constant 0 : index
      %37 = vector.load %arg3[%c0_36, %c0_37, %c0_38] : memref<2x8x64xf32, #tpu.memory_space<vmem>>, vector<2x8x64xf32>
      %cst_39 = arith.constant 1.250000e-01 : f32
      %38 = vector.broadcast %cst_39 : f32 to vector<2x8x64xf32>
      %39 = arith.mulf %37, %38 : vector<2x8x64xf32>
      %c0_40 = arith.constant 0 : index
      %c0_41 = arith.constant 0 : index
      %c0_42 = arith.constant 0 : index
      %40 = vector.load %arg8[%c0_40, %c0_41, %c0_42] : memref<2x8x64xf32, #tpu.memory_space<vmem>>, vector<2x8x64xf32>
      tpu.vector_store %arg8[%c0_40, %c0_41, %c0_42], %39 {strides = array<i32>} : memref<2x8x64xf32, #tpu.memory_space<vmem>>, vector<2x8x64xf32>,
      %cst_43 = arith.constant -1.000000e+30 : f32
      %41 = vector.broadcast %cst_43 : f32 to vector<2x8x1xf32>
      %c0_44 = arith.constant 0 : index
      %c0_45 = arith.constant 0 : index
      %c0_46 = arith.constant 0 : index
      %42 = vector.load %arg9[%c0_44, %c0_45, %c0_46] : memref<2x8x1xf32, #tpu.memory_space<vmem>>, vector<2x8x1xf32>
      tpu.vector_store %arg9[%c0_44, %c0_45, %c0_46], %41 {strides = array<i32>} : memref<2x8x1xf32, #tpu.memory_space<vmem>>, vector<2x8x1xf32>,
      %cst_47 = arith.constant 0.000000e+00 : f32
      %43 = vector.broadcast %cst_47 : f32 to vector<2x8x1xf32>
      %c0_48 = arith.constant 0 : index
      %c0_49 = arith.constant 0 : index
      %c0_50 = arith.constant 0 : index
      %44 = vector.load %arg10[%c0_48, %c0_49, %c0_50] : memref<2x8x1xf32, #tpu.memory_space<vmem>>, vector<2x8x1xf32>
      tpu.vector_store %arg10[%c0_48, %c0_49, %c0_50], %43 {strides = array<i32>} : memref<2x8x1xf32, #tpu.memory_space<vmem>>, vector<2x8x1xf32>,
      %cst_51 = arith.constant 0.000000e+00 : f32
      %45 = vector.broadcast %cst_51 : f32 to vector<2x8x64xf32>
      %c0_52 = arith.constant 0 : index
      %c0_53 = arith.constant 0 : index
      %c0_54 = arith.constant 0 : index
      %46 = vector.load %arg11[%c0_52, %c0_53, %c0_54] : memref<2x8x64xf32, #tpu.memory_space<vmem>>, vector<2x8x64xf32>
      tpu.vector_store %arg11[%c0_52, %c0_53, %c0_54], %45 {strides = array<i32>} : memref<2x8x64xf32, #tpu.memory_space<vmem>>, vector<2x8x64xf32>,
    } else {
    }
    %c0 = arith.constant 0 : index
    %c0_1 = arith.constant 0 : index
    %c0_2 = arith.constant 0 : index
    %3 = vector.load %arg8[%c0, %c0_1, %c0_2] : memref<2x8x64xf32, #tpu.memory_space<vmem>>, vector<2x8x64xf32>
    %c0_3 = arith.constant 0 : index
    %c0_4 = arith.constant 0 : index
    %c0_5 = arith.constant 0 : index
    %4 = vector.load %arg4[%c0_3, %c0_4, %c0_5] : memref<2x8x64xf32, #tpu.memory_space<vmem>>, vector<2x8x64xf32>
    %cst = arith.constant dense<0.000000e+00> : vector<2x8x8xf32>
    %5 = tpu.matmul %3, %4, %cst {dimension_numbers = #tpu.dot_dimension_numbers<[2], [2], [1], [1], [0, 0, 0, 1, 1, 1], [0], [0]>, precision = #tpu.contract_precision<fp32>} : vector<2x8x64xf32>, vector<2x8x64xf32>, vector<2x8x8xf32> -> vector<2x8x8xf32>
    %c0_6 = arith.constant 0 : index
    %c0_7 = arith.constant 0 : index
    %c0_8 = arith.constant 0 : index
    %6 = vector.load %arg6[%c0_6, %c0_7, %c0_8] : memref<2x8x8xi8, #tpu.memory_space<vmem>>, vector<2x8x8xi8>
    %c0_i8 = arith.constant 0 : i8
    %7 = vector.broadcast %c0_i8 : i8 to vector<2x8x8xi8>
    %8 = arith.cmpi ne, %6, %7 : vector<2x8x8xi8>
    %cst_9 = arith.constant -1.000000e+09 : f32
    %9 = vector.broadcast %cst_9 : f32 to vector<2x8x8xf32>
    %10 = arith.select %8, %9, %5 : vector<2x8x8xi1>, vector<2x8x8xf32>
    %c0_10 = arith.constant 0 : index
    %c0_11 = arith.constant 0 : index
    %c0_12 = arith.constant 0 : index
    %11 = vector.load %arg9[%c0_10, %c0_11, %c0_12] : memref<2x8x1xf32, #tpu.memory_space<vmem>>, vector<2x8x1xf32>
    %cst_13 = arith.constant dense<0xFF800000> : vector<2x8xf32>
    %12 = vector.multi_reduction <maximumf>, %10, %cst_13 [2] : vector<2x8x8xf32> to vector<2x8xf32>
    %13 = vector.shape_cast %12 : vector<2x8xf32> to vector<2x8x1xf32>
    %14 = arith.maximumf %11, %13 : vector<2x8x1xf32>
    %15 = arith.subf %11, %14 : vector<2x8x1xf32>
    %16 = math.exp %15 : vector<2x8x1xf32>
    %17 = vector.broadcast %14 : vector<2x8x1xf32> to vector<2x8x8xf32>
    %18 = arith.subf %10, %17 : vector<2x8x8xf32>
    %19 = math.exp %18 : vector<2x8x8xf32>
    %c0_14 = arith.constant 0 : index
    %c0_15 = arith.constant 0 : index
    %c0_16 = arith.constant 0 : index
    %20 = vector.load %arg10[%c0_14, %c0_15, %c0_16] : memref<2x8x1xf32, #tpu.memory_space<vmem>>, vector<2x8x1xf32>
    %21 = arith.mulf %16, %20 : vector<2x8x1xf32>
    %cst_17 = arith.constant dense<0.000000e+00> : vector<2x8xf32>
    %22 = vector.multi_reduction <add>, %19, %cst_17 [2] : vector<2x8x8xf32> to vector<2x8xf32>
    %23 = vector.shape_cast %22 : vector<2x8xf32> to vector<2x8x1xf32>
    %24 = arith.addf %21, %23 : vector<2x8x1xf32>
    %c0_18 = arith.constant 0 : index
    %c0_19 = arith.constant 0 : index
    %c0_20 = arith.constant 0 : index
    %25 = vector.load %arg10[%c0_18, %c0_19, %c0_20] : memref<2x8x1xf32, #tpu.memory_space<vmem>>, vector<2x8x1xf32>
    tpu.vector_store %arg10[%c0_18, %c0_19, %c0_20], %24 {strides = array<i32>} : memref<2x8x1xf32, #tpu.memory_space<vmem>>, vector<2x8x1xf32>,
    %c0_21 = arith.constant 0 : index
    %c0_22 = arith.constant 0 : index
    %c0_23 = arith.constant 0 : index
    %26 = vector.load %arg11[%c0_21, %c0_22, %c0_23] : memref<2x8x64xf32, #tpu.memory_space<vmem>>, vector<2x8x64xf32>
    %27 = vector.broadcast %16 : vector<2x8x1xf32> to vector<2x8x64xf32>
    %28 = arith.mulf %27, %26 : vector<2x8x64xf32>
    %c0_24 = arith.constant 0 : index
    %c0_25 = arith.constant 0 : index
    %c0_26 = arith.constant 0 : index
    %29 = vector.load %arg5[%c0_24, %c0_25, %c0_26] : memref<2x8x64xf32, #tpu.memory_space<vmem>>, vector<2x8x64xf32>
    %cst_27 = arith.constant dense<0.000000e+00> : vector<2x8x64xf32>
    %30 = tpu.matmul %19, %29, %cst_27 {dimension_numbers = #tpu.dot_dimension_numbers<[2], [1], [1], [2], [0, 0, 0, 1, 1, 2], [0], [0]>, precision = #tpu.contract_precision<fp32>} : vector<2x8x8xf32>, vector<2x8x64xf32>, vector<2x8x64xf32> -> vector<2x8x64xf32>
    %31 = arith.addf %28, %30 : vector<2x8x64xf32>
    %c0_28 = arith.constant 0 : index
    %c0_29 = arith.constant 0 : index
    %c0_30 = arith.constant 0 : index
    %32 = vector.load %arg11[%c0_28, %c0_29, %c0_30] : memref<2x8x64xf32, #tpu.memory_space<vmem>>, vector<2x8x64xf32>
    tpu.vector_store %arg11[%c0_28, %c0_29, %c0_30], %31 {strides = array<i32>} : memref<2x8x64xf32, #tpu.memory_space<vmem>>, vector<2x8x64xf32>,
    %c0_31 = arith.constant 0 : index
    %c0_32 = arith.constant 0 : index
    %c0_33 = arith.constant 0 : index
    %33 = vector.load %arg9[%c0_31, %c0_32, %c0_33] : memref<2x8x1xf32, #tpu.memory_space<vmem>>, vector<2x8x1xf32>
    tpu.vector_store %arg9[%c0_31, %c0_32, %c0_33], %14 {strides = array<i32>} : memref<2x8x1xf32, #tpu.memory_space<vmem>>, vector<2x8x1xf32>,
    %c0_i32_34 = arith.constant 0 : i32
    %34 = arith.cmpi eq, %arg2, %c0_i32_34 : i32
    %35 = arith.extui %34 : i1 to i32
    %c0_i32_35 = arith.constant 0 : i32
    %36 = arith.cmpi ne, %35, %c0_i32_35 : i32
    scf.if %36 {
      %c0_36 = arith.constant 0 : index
      %c0_37 = arith.constant 0 : index
      %c0_38 = arith.constant 0 : index
      %37 = vector.load %arg11[%c0_36, %c0_37, %c0_38] : memref<2x8x64xf32, #tpu.memory_space<vmem>>, vector<2x8x64xf32>
      %c0_39 = arith.constant 0 : index
      %c0_40 = arith.constant 0 : index
      %c0_41 = arith.constant 0 : index
      %38 = vector.load %arg10[%c0_39, %c0_40, %c0_41] : memref<2x8x1xf32, #tpu.memory_space<vmem>>, vector<2x8x1xf32>
      %39 = vector.broadcast %38 : vector<2x8x1xf32> to vector<2x8x64xf32>
      %40 = arith.divf %37, %39 : vector<2x8x64xf32>
      %c0_42 = arith.constant 0 : index
      %c0_43 = arith.constant 0 : index
      %c0_44 = arith.constant 0 : index
      %41 = vector.load %arg7[%c0_42, %c0_43, %c0_44] : memref<2x8x64xf32, #tpu.memory_space<vmem>>, vector<2x8x64xf32>
      tpu.vector_store %arg7[%c0_42, %c0_43, %c0_44], %40 {strides = array<i32>} : memref<2x8x64xf32, #tpu.memory_space<vmem>>, vector<2x8x64xf32>,
    } else {
    }
    return
  }
  func.func @transform_0(%arg0: i32, %arg1: i32, %arg2: i32) -> (i32, i32, i32) {
    %c0_i32 = arith.constant 0 : i32
    %c0_i32_0 = arith.constant 0 : i32
    return %arg0, %arg1, %c0_i32 : i32, i32, i32
  }
  func.func @transform_1(%arg0: i32, %arg1: i32, %arg2: i32) -> (i32, i32, i32) {
    %c0_i32 = arith.constant 0 : i32
    %c0_i32_0 = arith.constant 0 : i32
    return %arg0, %arg2, %c0_i32 : i32, i32, i32
  }
  func.func @transform_2(%arg0: i32, %arg1: i32, %arg2: i32) -> (i32, i32, i32) {
    %c0_i32 = arith.constant 0 : i32
    %c0_i32_0 = arith.constant 0 : i32
    return %arg0, %arg2, %c0_i32 : i32, i32, i32
  }
  func.func @transform_3(%arg0: i32, %arg1: i32, %arg2: i32) -> (i32, i32, i32) {
    %c0_i32 = arith.constant 0 : i32
    return %arg0, %arg1, %arg2 : i32, i32, i32
  }
  func.func @transform_4(%arg0: i32, %arg1: i32, %arg2: i32) -> (i32, i32, i32) {
    %c0_i32 = arith.constant 0 : i32
    %c0_i32_0 = arith.constant 0 : i32
    return %arg0, %arg1, %c0_i32 : i32, i32, i32
  }
}

</mosaic_0001>

<llo_original>
// kernel: tpu_custom_call.1
$region0: #{tpu_custom_call.1}
  #allocation0 [shape = 'u32[]', space=smem, size = 0x4, offset = 0x4, fixed_abs, tag = 'smem constant byte address 0x4 - core index']
  #allocation1 [shape = 'u32[144,128]{1,0:T(1,128)}', space=vmem, size = 0x12000, scoped, tag = 'internal scratch']
  #allocation2 [shape = 'f32[2,8,64]{2,1,0:T(8,128)}', space=vmem, size = 0x2000, scoped, tag = 'scratch operand']
  #allocation3 [shape = 'f32[2,8,1]{2,1,0:T(8,128)}', space=vmem, size = 0x2000, scoped, tag = 'scratch operand']
  #allocation4 [shape = 'f32[2,8,1]{2,1,0:T(8,128)}', space=vmem, size = 0x2000, scoped, tag = 'scratch operand']
  #allocation5 [shape = 'f32[2,8,64]{2,1,0:T(8,128)}', space=vmem, size = 0x2000, scoped, tag = 'scratch operand']
  %s0 = inlined_call_operand.hbm [shape: f32[4,8,64], index: 0, kind: input, shape index: {}]
  %s1 = inlined_call_operand.hbm [shape: f32[4,8,64], index: 1, kind: input, shape index: {}]
  %s2 = inlined_call_operand.hbm [shape: f32[4,8,64], index: 2, kind: input, shape index: {}]
  %s3 = inlined_call_operand.hbm [shape: s8[4,8,8], index: 3, kind: input, shape index: {}]
  %s4 = inlined_call_operand.hbm [shape: f32[4,8,64], index: 4, kind: output, shape index: {}]
  %s5 = sld [smem:[#allocation0]]
  $region73: #{tpu_custom_call.1} parent=0
    _
  %s7 = ssub.s32 1, %s5
  %s8 = scalar_select 0, %s7, %s5
  $region1: #{tpu_custom_call.1} parent=0
    #allocation6 [shape = 'u8[16384]{0}', space=vmem, size = 0x4000, scoped, tag = 'input window, operand 0']
    #allocation7 [shape = 's32[2]{0}', space=sflag, size = 0x8, scoped, tag = 'scoped memory for tpu_custom_call.1']
    #allocation8 [shape = 's32[2]{0}', space=sflag, size = 0x8, scoped, tag = 'scoped memory for tpu_custom_call.1']
    #allocation9 [shape = 'u8[16384]{0}', space=vmem, size = 0x4000, scoped, tag = 'input window, operand 1']
    #allocation10 [shape = 's32[2]{0}', space=sflag, size = 0x8, scoped, tag = 'scoped memory for tpu_custom_call.1']
    #allocation11 [shape = 'u8[16384]{0}', space=vmem, size = 0x4000, scoped, tag = 'input window, operand 2']
    #allocation12 [shape = 'u8[4096]{0}', space=vmem, size = 0x1000, scoped, tag = 'input window, operand 3']
    #allocation13 [shape = 's32[2]{0}', space=sflag, size = 0x8, scoped, tag = 'scoped memory for tpu_custom_call.1']
    #allocation14 [shape = 'u8[16384]{0}', space=vmem, size = 0x4000, scoped, tag = 'output window, operand 0']
    %9 = vsyncpa [#allocation7], 0
    %s10 = scalar_lea.sflag [#allocation7], 1
    %11 = vsyncpa %s10, 0
    %12 = vsyncpa [#allocation10], 0
    %s13 = scalar_lea.sflag [#allocation10], 1
    %14 = vsyncpa %s13, 0
    %15 = vsyncpa [#allocation13], 0
    %s16 = scalar_lea.sflag [#allocation13], 1
    %17 = vsyncpa %s16, 0
    %18 = vsyncpa [#allocation8], 0
    %s19 = scalar_lea.sflag [#allocation8], 1
    %20 = vsyncpa %s19, 0
    loop: start=0, step=1, limit=4
    $region2: #{tpu_custom_call.1} parent=1 // loop_pre_header
      _
    $region3: #{tpu_custom_call.1} parent=1 // loop_header
      %s22 = sphi 0, %s26
      %p23 = scmp.ge.s32.totalorder %s22, 4
      %s29 = sphi 0, %s48
      %s30 = sphi 0, %s44
      %s31 = sphi 0, %s40
      %s32 = sphi 0, %s29
      %s33 = sphi 0, %s30
      %s34 = sphi 0, %s31
      %s35 = sphi 0, %s32
      %s36 = sphi 0, %s33
      %s37 = sphi 0, %s34
      %s53 = sphi 0, %s55
      %s56 = sphi 0, %s53
      %s57 = sphi 0, %s56
      %s73 = sphi 0, %s57
      %s81 = sphi 0, %s83
      %s84 = sphi 0, %s81
      %s85 = sphi 0, %s84
      %s101 = sphi 0, %s85
      %s109 = sphi 0, %s111
      %s112 = sphi 0, %s109
      %s113 = sphi 0, %s112
      %s129 = sphi 0, %s113
      %s139 = sphi 0, %s141
      %s142 = sphi 0, %s139
      %s143 = sphi 0, %s142
      %s159 = sphi 0, %s143
      %s167 = sphi 0, %s169
      %s170 = sphi 0, %s167
      %s171 = sphi 0, %s170
      %s187 = sphi 0, %s171
    $region4: #{tpu_custom_call.1} parent=1 // loop_header_branch
      %25 = sbr.rel (%p23) target = $region8
    $region5: #{tpu_custom_call.1} parent=1 // loop_body
      %s27 = ssub.s32 %s22, 1
      %s28 = ssub.s32 %s22, 2
      %s38 = sadd.s32 1, %s31
      %p39 = scmp.ge.s32.totalorder %s38, 1
      %s40 = scalar_select %p39, 0, %s38
      %s41 = sadd.s32 1, %s30
      %s42 = scalar_select %p39, %s41, %s30
      %p43 = scmp.ge.s32.totalorder %s42, 1
      %s44 = scalar_select %p43, 0, %s42
      %s45 = sadd.s32 1, %s29
      %s46 = scalar_select %p43, %s45, %s29
      %p47 = scmp.ge.s32.totalorder %s46, 2
      %s48 = scalar_select %p47, 0, %s46
      %s49 = ssub.s32 %s29, %s48
      %s50 = ssub.s32 %s30, %s44
      %s51 = sor.u32 %s49, %s50
      %p52 = scmp.eq.s32.totalorder %s51, 0
      %s54 = sadd.s32 %s53, 1
      %s55 = scalar_select %p52, %s53, %s54
      %p58 = pneg %p52
      %p59 = scmp.eq.s32.totalorder %s22, 1
      %p60 = por %p58, %p59
      %p61 = scmp.ne.s32.totalorder %s53, %s56
      %p62 = scmp.eq.s32.totalorder %s22, 0
      %p63 = por %p61, %p62
      %p64 = scmp.ne.s32.totalorder %s53, %s56
      %p65 = scmp.eq.s32.totalorder %s27, 1
      %p66 = por %p64, %p65
      %p67 = scmp.ne.s32.totalorder %s56, %s57
      %p68 = scmp.eq.s32.totalorder %s27, 0
      %p69 = por %p67, %p68
      %p70 = scmp.ne.s32.totalorder %s56, %s57
      %p71 = scmp.eq.s32.totalorder %s28, 1
      %p72 = por %p70, %p71
      %p74 = scmp.ne.s32.totalorder %s57, %s73
      %p75 = scmp.eq.s32.totalorder %s28, 0
      %p76 = por %p74, %p75
      %s77 = ssub.s32 %s29, %s48
      %s78 = ssub.s32 %s31, %s40
      %s79 = sor.u32 %s77, %s78
      %p80 = scmp.eq.s32.totalorder %s79, 0
      %s82 = sadd.s32 %s81, 1
      %s83 = scalar_select %p80, %s81, %s82
      %p86 = pneg %p80
      %p87 = scmp.eq.s32.totalorder %s22, 1
      %p88 = por %p86, %p87
      %p89 = scmp.ne.s32.totalorder %s81, %s84
      %p90 = scmp.eq.s32.totalorder %s22, 0
      %p91 = por %p89, %p90
      %p92 = scmp.ne.s32.totalorder %s81, %s84
      %p93 = scmp.eq.s32.totalorder %s27, 1
      %p94 = por %p92, %p93
      %p95 = scmp.ne.s32.totalorder %s84, %s85
      %p96 = scmp.eq.s32.totalorder %s27, 0
      %p97 = por %p95, %p96
      %p98 = scmp.ne.s32.totalorder %s84, %s85
      %p99 = scmp.eq.s32.totalorder %s28, 1
      %p100 = por %p98, %p99
      %p102 = scmp.ne.s32.totalorder %s85, %s101
      %p103 = scmp.eq.s32.totalorder %s28, 0
      %p104 = por %p102, %p103
      %s105 = ssub.s32 %s29, %s48
      %s106 = ssub.s32 %s31, %s40
      %s107 = sor.u32 %s105, %s106
      %p108 = scmp.eq.s32.totalorder %s107, 0
      %s110 = sadd.s32 %s109, 1
      %s111 = scalar_select %p108, %s109, %s110
      %p114 = pneg %p108
      %p115 = scmp.eq.s32.totalorder %s22, 1
      %p116 = por %p114, %p115
      %p117 = scmp.ne.s32.totalorder %s109, %s112
      %p118 = scmp.eq.s32.totalorder %s22, 0
      %p119 = por %p117, %p118
      %p120 = scmp.ne.s32.totalorder %s109, %s112
      %p121 = scmp.eq.s32.totalorder %s27, 1
      %p122 = por %p120, %p121
      %p123 = scmp.ne.s32.totalorder %s112, %s113
      %p124 = scmp.eq.s32.totalorder %s27, 0
      %p125 = por %p123, %p124
      %p126 = scmp.ne.s32.totalorder %s112, %s113
      %p127 = scmp.eq.s32.totalorder %s28, 1
      %p128 = por %p126, %p127
      %p130 = scmp.ne.s32.totalorder %s113, %s129
      %p131 = scmp.eq.s32.totalorder %s28, 0
      %p132 = por %p130, %p131
      %s133 = ssub.s32 %s29, %s48
      %s134 = ssub.s32 %s30, %s44
      %s135 = sor.u32 %s133, %s134
      %s136 = ssub.s32 %s31, %s40
      %s137 = sor.u32 %s135, %s136
      %p138 = scmp.eq.s32.totalorder %s137, 0
      %s140 = sadd.s32 %s139, 1
      %s141 = scalar_select %p138, %s139, %s140
      %p144 = pneg %p138
      %p145 = scmp.eq.s32.totalorder %s22, 1
      %p146 = por %p144, %p145
      %p147 = scmp.ne.s32.totalorder %s139, %s142
      %p148 = scmp.eq.s32.totalorder %s22, 0
      %p149 = por %p147, %p148
      %p150 = scmp.ne.s32.totalorder %s139, %s142
      %p151 = scmp.eq.s32.totalorder %s27, 1
      %p152 = por %p150, %p151
      %p153 = scmp.ne.s32.totalorder %s142, %s143
      %p154 = scmp.eq.s32.totalorder %s27, 0
      %p155 = por %p153, %p154
      %p156 = scmp.ne.s32.totalorder %s142, %s143
      %p157 = scmp.eq.s32.totalorder %s28, 1
      %p158 = por %p156, %p157
      %p160 = scmp.ne.s32.totalorder %s143, %s159
      %p161 = scmp.eq.s32.totalorder %s28, 0
      %p162 = por %p160, %p161
      %s163 = ssub.s32 %s29, %s48
      %s164 = ssub.s32 %s30, %s44
      %s165 = sor.u32 %s163, %s164
      %p166 = scmp.eq.s32.totalorder %s165, 0
      %s168 = sadd.s32 %s167, 1
      %s169 = scalar_select %p166, %s167, %s168
      %p172 = pneg %p166
      %p173 = scmp.eq.s32.totalorder %s22, 1
      %p174 = por %p172, %p173
      %p175 = scmp.ne.s32.totalorder %s167, %s170
      %p176 = scmp.eq.s32.totalorder %s22, 0
      %p177 = por %p175, %p176
      %p178 = scmp.ne.s32.totalorder %s167, %s170
      %p179 = scmp.eq.s32.totalorder %s27, 1
      %p180 = por %p178, %p179
      %p181 = scmp.ne.s32.totalorder %s170, %s171
      %p182 = scmp.eq.s32.totalorder %s27, 0
      %p183 = por %p181, %p182
      %p184 = scmp.ne.s32.totalorder %s170, %s171
      %p185 = scmp.eq.s32.totalorder %s28, 1
      %p186 = por %p184, %p185
      %p188 = scmp.ne.s32.totalorder %s171, %s187
      %p189 = scmp.eq.s32.totalorder %s28, 0
      %p190 = por %p188, %p189
      %p191 = scmp.le.s32.totalorder 1, %s22
      %p192 = scmp.lt.s32.totalorder %s22, 3
      %p193 = pnand %p191, %p192
      %p194 = pneg %p193
      // Predicated region
      $region9: #{tpu_custom_call.1} parent=5 // pred_check
        _
      $region10: #{tpu_custom_call.1} parent=5 // pred_check_branch
        %196 = sbr.rel (%p193) target = $region12
      $region11: #{tpu_custom_call.1} parent=5 // pred_region
        %s197 = ssub.s32 %s22, 1
      $region12: #{tpu_custom_call.1} parent=5 // pred_fallthru
        _
      %p198 = scmp.lt.s32.totalorder %s22, 2
      // Predicated region
      $region13: #{tpu_custom_call.1} parent=5 // pred_check
        %p199 = pneg %p198
      $region14: #{tpu_custom_call.1} parent=5 // pred_check_branch
        %201 = sbr.rel (%p199) target = $region16
      $region15: #{tpu_custom_call.1} parent=5 // pred_region
        // Predicated region
        $region17: #{tpu_custom_call.1} parent=15 // pred_check
          %p202 = pneg %p63
        $region18: #{tpu_custom_call.1} parent=15 // pred_check_branch
          %204 = sbr.rel (%p202) target = $region20
        $region19: #{tpu_custom_call.1} parent=15 // pred_region
          %s205 = sand.u32 %s53, 1
          %s206 = scalar_lea.sflag [#allocation7], %s205
          %s207 = sand.u32 %s53, 1
          %s208 = smul.addr %s207, 16
          %s209 = scalar_lea.vmem [#allocation6], %s208
          %s210 = smul.u32 2, %s29
          %s212 = ssub.s32 256, 256
          %213 = vsyncadd %s206, %s212
          %s214 = sadd.s32 %s30, %s210
          %s215 = smul.addr %s214, 128
          %s216 = scalar_lea.hbm %s0, %s215
          %s217 = sshll.u32 %s209, 4
          %s218 = int_to_ptr.vmem [resolvable:$true] %s217
          %223 = dma.hbm_to_vmem [thread:$0]  %s216, 256, %s218, %s206, 128, 128, 8
        $region20: #{tpu_custom_call.1} parent=15 // pred_fallthru
          _
        // Predicated region
        $region21: #{tpu_custom_call.1} parent=15 // pred_check
          %p224 = pneg %p91
        $region22: #{tpu_custom_call.1} parent=15 // pred_check_branch
          %226 = sbr.rel (%p224) target = $region24
        $region23: #{tpu_custom_call.1} parent=15 // pred_region
          %s227 = sand.u32 %s22, 1
          %s228 = scalar_lea.sflag [#allocation10], %s227
          %s229 = sand.u32 %s81, 1
          %s230 = smul.addr %s229, 16
          %s231 = scalar_lea.vmem [#allocation9], %s230
          %s232 = smul.u32 2, %s29
          %s234 = ssub.s32 256, 256
          %235 = vsyncadd %s228, %s234
          %s236 = sadd.s32 %s31, %s232
          %s237 = smul.addr %s236, 128
          %s238 = scalar_lea.hbm %s1, %s237
          %s239 = sshll.u32 %s231, 4
          %s240 = int_to_ptr.vmem [resolvable:$true] %s239
          %245 = dma.hbm_to_vmem [thread:$0]  %s238, 256, %s240, %s228, 128, 128, 8
        $region24: #{tpu_custom_call.1} parent=15 // pred_fallthru
          _
        // Predicated region
        $region25: #{tpu_custom_call.1} parent=15 // pred_check
          %p246 = pneg %p119
        $region26: #{tpu_custom_call.1} parent=15 // pred_check_branch
          %248 = sbr.rel (%p246) target = $region28
        $region27: #{tpu_custom_call.1} parent=15 // pred_region
          %s249 = sand.u32 %s22, 1
          %s250 = scalar_lea.sflag [#allocation10], %s249
          %s251 = sand.u32 %s109, 1
          %s252 = smul.addr %s251, 16
          %s253 = scalar_lea.vmem [#allocation11], %s252
          %s254 = smul.u32 2, %s29
          %s256 = ssub.s32 256, 256
          %257 = vsyncadd %s250, %s256
          %s258 = sadd.s32 %s31, %s254
          %s259 = smul.addr %s258, 128
          %s260 = scalar_lea.hbm %s2, %s259
          %s261 = sshll.u32 %s253, 4
          %s262 = int_to_ptr.vmem [resolvable:$true] %s261
          %267 = dma.hbm_to_vmem [thread:$0]  %s260, 256, %s262, %s250, 128, 128, 8
        $region28: #{tpu_custom_call.1} parent=15 // pred_fallthru
          _
        // Predicated region
        $region29: #{tpu_custom_call.1} parent=15 // pred_check
          %p268 = pneg %p149
        $region30: #{tpu_custom_call.1} parent=15 // pred_check_branch
          %270 = sbr.rel (%p268) target = $region32
        $region31: #{tpu_custom_call.1} parent=15 // pred_region
          %s271 = sand.u32 %s139, 1
          %s272 = scalar_lea.sflag [#allocation13], %s271
          %s273 = sand.u32 %s139, 1
          %s274 = smul.addr %s273, 4
          %s275 = scalar_lea.vmem [#allocation12], %s274
          %s276 = smul.u32 2, %s29
          %s278 = ssub.s32 64, 64
          %279 = vsyncadd %s272, %s278
          %s280 = sadd.s32 %s31, %s30
          %s281 = sadd.s32 %s280, %s276
          %s282 = smul.addr %s281, 32
          %s283 = scalar_lea.hbm %s3, %s282
          %s284 = sshll.u32 %s275, 4
          %s285 = int_to_ptr.vmem [resolvable:$true] %s284
          %290 = dma.hbm_to_vmem [thread:$0]  %s283, 64, %s285, %s272, 32, 32, 2
        $region32: #{tpu_custom_call.1} parent=15 // pred_fallthru
          _
      $region16: #{tpu_custom_call.1} parent=5 // pred_fallthru
        _
      %p291 = scmp.le.s32.totalorder 1, %s22
      %p292 = scmp.lt.s32.totalorder %s22, 3
      %p293 = pnand %p291, %p292
      %p294 = pneg %p293
      // Predicated region
      $region33: #{tpu_custom_call.1} parent=5 // pred_check
        _
      $region34: #{tpu_custom_call.1} parent=5 // pred_check_branch
        %296 = sbr.rel (%p293) target = $region36
      $region35: #{tpu_custom_call.1} parent=5 // pred_region
        %s297 = ssub.s32 %s22, 1
        %s298 = sand.u32 %s56, 1
        %s299 = scalar_lea.sflag [#allocation7], %s298
        %s300 = sand.u32 %s56, 1
        %s301 = smul.addr %s300, 16
        %s302 = scalar_lea.vmem [#allocation6], %s301
        // Predicated region
        $region37: #{tpu_custom_call.1} parent=35 // pred_check
          %p303 = pneg %p69
        $region38: #{tpu_custom_call.1} parent=35 // pred_check_branch
          %305 = sbr.rel (%p303) target = $region40
        $region39: #{tpu_custom_call.1} parent=35 // pred_region
          %306 = dma.done %s299, 256
        $region40: #{tpu_custom_call.1} parent=35 // pred_fallthru
          _
        %s307 = sand.u32 %s27, 1
        %s308 = scalar_lea.sflag [#allocation10], %s307
        %s309 = sand.u32 %s84, 1
        %s310 = smul.addr %s309, 16
        %s311 = scalar_lea.vmem [#allocation9], %s310
        // Predicated region
        $region41: #{tpu_custom_call.1} parent=35 // pred_check
          %p312 = pneg %p97
        $region42: #{tpu_custom_call.1} parent=35 // pred_check_branch
          %314 = sbr.rel (%p312) target = $region44
        $region43: #{tpu_custom_call.1} parent=35 // pred_region
          %315 = dma.done %s308, 256
        $region44: #{tpu_custom_call.1} parent=35 // pred_fallthru
          _
        %s316 = sand.u32 %s27, 1
        %s317 = scalar_lea.sflag [#allocation10], %s316
        %s318 = sand.u32 %s112, 1
        %s319 = smul.addr %s318, 16
        %s320 = scalar_lea.vmem [#allocation11], %s319
        // Predicated region
        $region45: #{tpu_custom_call.1} parent=35 // pred_check
          %p321 = pneg %p125
        $region46: #{tpu_custom_call.1} parent=35 // pred_check_branch
          %323 = sbr.rel (%p321) target = $region48
        $region47: #{tpu_custom_call.1} parent=35 // pred_region
          %324 = dma.done %s317, 256
        $region48: #{tpu_custom_call.1} parent=35 // pred_fallthru
          _
        %s325 = sand.u32 %s142, 1
        %s326 = scalar_lea.sflag [#allocation13], %s325
        %s327 = sand.u32 %s142, 1
        %s328 = smul.addr %s327, 4
        %s329 = scalar_lea.vmem [#allocation12], %s328
        // Predicated region
        $region49: #{tpu_custom_call.1} parent=35 // pred_check
          %p330 = pneg %p155
        $region50: #{tpu_custom_call.1} parent=35 // pred_check_branch
          %332 = sbr.rel (%p330) target = $region52
        $region51: #{tpu_custom_call.1} parent=35 // pred_region
          %333 = dma.done %s326, 64
        $region52: #{tpu_custom_call.1} parent=35 // pred_fallthru
          _
        %s334 = sand.u32 %s56, 1
        %s335 = scalar_lea.sflag [#allocation7], %s334
        %s336 = sand.u32 %s56, 1
        %s337 = smul.addr %s336, 16
        %s338 = scalar_lea.vmem [#allocation6], %s337
        %p339 = pneg %p69
        %p340 = pneg %p66
        %s341 = sand.u32 %s27, 1
        %s342 = scalar_lea.sflag [#allocation10], %s341
        %s343 = sand.u32 %s84, 1
        %s344 = smul.addr %s343, 16
        %s345 = scalar_lea.vmem [#allocation9], %s344
        %p346 = pneg %p97
        %p347 = pneg %p94
        %s348 = sand.u32 %s27, 1
        %s349 = scalar_lea.sflag [#allocation10], %s348
        %s350 = sand.u32 %s112, 1
        %s351 = smul.addr %s350, 16
        %s352 = scalar_lea.vmem [#allocation11], %s351
        %p353 = pneg %p125
        %p354 = pneg %p122
        %s355 = sand.u32 %s142, 1
        %s356 = scalar_lea.sflag [#allocation13], %s355
        %s357 = sand.u32 %s142, 1
        %s358 = smul.addr %s357, 4
        %s359 = scalar_lea.vmem [#allocation12], %s358
        %p360 = pneg %p155
        %p361 = pneg %p152
        %p362 = pneg %p183
        %p363 = pneg %p180
        %s364 = sand.u32 %s170, 1
        %s365 = scalar_lea.sflag [#allocation8], %s364
        %s366 = sand.u32 %s170, 1
        %s367 = smul.addr %s366, 16
        %s368 = scalar_lea.vmem [#allocation14], %s367
        %s369 = smul.u32 2, %s32
        %s370 = smul.u32 2, %s32
        %s371 = smul.u32 2, %s32
        %s372 = smul.u32 2, %s32
        %s373 = smul.u32 2, %s32
        %p376 = scmp.eq.s32.totalorder %s34, 0
        // Predicated region
        $region53: #{tpu_custom_call.1} parent=35 // pred_check
          %p377 = pneg %p376
        $region54: #{tpu_custom_call.1} parent=35 // pred_check_branch
          %379 = sbr.rel (%p377) target = $region56
        $region55: #{tpu_custom_call.1} parent=35 // pred_region
          %v380 = vld [vmem:[%s302] sm:$0xff]
          %v381 = vld [vmem:[%s302 + $0x8] sm:$0xff]
          %v382 = vmul.f32 %v380, 0.125
          %v383 = vmul.f32 %v381, 0.125
          %vm384 = vcmask 523264
          %385 = vst.msk [vmem:[#allocation2] sm:$0xff] %vm384, %v382
          %386 = vst.msk [vmem:[#allocation2 + $0x8] sm:$0xff] %vm384, %v383
          %vm387 = vcmask 7168
          %388 = vst.msk [vmem:[#allocation3] sm:$0xff] %vm387, -1e+30
          %389 = vst.msk [vmem:[#allocation3 + $0x8] sm:$0xff] %vm387, -1e+30
          %390 = vst.msk [vmem:[#allocation4] sm:$0xff] %vm387, 0.0
          %391 = vst.msk [vmem:[#allocation4 + $0x8] sm:$0xff] %vm387, 0.0
          %392 = vst.msk [vmem:[#allocation5] sm:$0xff] %vm384, 0.0
          %393 = vst.msk [vmem:[#allocation5 + $0x8] sm:$0xff] %vm384, 0.0
        $region56: #{tpu_custom_call.1} parent=35 // pred_fallthru
          _
        %v394 = vld [vmem:[#allocation2] sm:$0xff]
        %v395 = vld [vmem:[#allocation2 + $0x8] sm:$0xff]
        %v396 = vld [vmem:[%s311] sm:$0xff]
        %v397 = vld [vmem:[%s311 + $0x8] sm:$0xff]
        %vm398 = vcmask 523264
        %v400 = vsel %vm398, %v394, 0
        %v403 = vsel %vm398, %v396, 0
        %405 = vmatprep.subr.mxu0 0.0
        %406 = vmatpush1.xpose.msra.mxu0 0.0
        %407 = vmatprep.subr.mxu0 0.0
        %408 = vmatpush1.xpose.msra.mxu0 0.0
        %409 = vmatprep.subr.mxu0 0.0
        %410 = vmatpush1.xpose.msra.mxu0 0.0
        %411 = vmatprep.subr.mxu0 0.0
        %412 = vmatpush1.xpose.msra.mxu0 0.0
        %413 = vmatprep.subr.mxu0 0.0
        %414 = vmatpush1.xpose.msra.mxu0 0.0
        %415 = vmatprep.subr.mxu0 0.0
        %416 = vmatpush1.xpose.msra.mxu0 0.0
        %417 = vmatprep.subr.mxu0 0.0
        %418 = vmatpush1.xpose.msra.mxu0 0.0
        %419 = vmatprep.subr.mxu0 0.0
        %420 = vmatpush1.xpose.msra.mxu0 0.0
        %421 = vmatprep.subr.mxu0 0.0
        %422 = vmatpush1.xpose.msra.mxu0 0.0
        %423 = vmatprep.subr.mxu0 0.0
        %424 = vmatpush1.xpose.msra.mxu0 0.0
        %425 = vmatprep.subr.mxu0 0.0
        %426 = vmatpush1.xpose.msra.mxu0 0.0
        %427 = vmatprep.subr.mxu0 0.0
        %428 = vmatpush1.xpose.msra.mxu0 0.0
        %429 = vmatprep.subr.mxu0 0.0
        %430 = vmatpush1.xpose.msra.mxu0 0.0
        %431 = vmatprep.subr.mxu0 0.0
        %432 = vmatpush1.xpose.msra.mxu0 0.0
        %433 = vmatprep.subr.mxu0 0.0
        %434 = vmatpush1.xpose.msra.mxu0 0.0
        %435 = vmatprep.subr.mxu0 0.0
        %v436 = vand.u32 %v403, 4294901760
        %437 = vmatpush1.xpose.msra.mxu0 %v436
        %438 = vmatprep.subr.mxu0 0.0
        %439 = vmatpush2.xpose.msra.mxu0 0.0
        %440 = vmatprep.subr.mxu0 0.0
        %441 = vmatpush2.xpose.msra.mxu0 0.0
        %442 = vmatprep.subr.mxu0 0.0
        %443 = vmatpush2.xpose.msra.mxu0 0.0
        %444 = vmatprep.subr.mxu0 0.0
        %445 = vmatpush2.xpose.msra.mxu0 0.0
        %446 = vmatprep.subr.mxu0 0.0
        %447 = vmatpush2.xpose.msra.mxu0 0.0
        %448 = vmatprep.subr.mxu0 0.0
        %449 = vmatpush2.xpose.msra.mxu0 0.0
        %450 = vmatprep.subr.mxu0 0.0
        %451 = vmatpush2.xpose.msra.mxu0 0.0
        %452 = vmatprep.subr.mxu0 0.0
        %453 = vmatpush2.xpose.msra.mxu0 0.0
        %454 = vmatprep.subr.mxu0 0.0
        %455 = vmatpush2.xpose.msra.mxu0 0.0
        %456 = vmatprep.subr.mxu0 0.0
        %457 = vmatpush2.xpose.msra.mxu0 0.0
        %458 = vmatprep.subr.mxu0 0.0
        %459 = vmatpush2.xpose.msra.mxu0 0.0
        %460 = vmatprep.subr.mxu0 0.0
        %461 = vmatpush2.xpose.msra.mxu0 0.0
        %462 = vmatprep.subr.mxu0 0.0
        %463 = vmatpush2.xpose.msra.mxu0 0.0
        %464 = vmatprep.subr.mxu0 0.0
        %465 = vmatpush2.xpose.msra.mxu0 0.0
        %466 = vmatprep.subr.mxu0 0.0
        %467 = vmatpush2.xpose.msra.mxu0 0.0
        %468 = vmatprep.subr.mxu0 0.0
        %469 = vmatpush2.xpose.msra.mxu0 0.0
        %470 = vmatprep.mubr.f32.mxu0 0.0
        %v471 = vand.u32 %v400, 4294901760
        %v472 = vsub.f32 %v400, %v471
        %v473 = vand.u32 %v472, 4294901760
        %v474 = vsub.f32 %v472, %v473
        %v475 = vand.u32 %v474, 4294901760
        %476 = vmatmul.mubr.f32.gmra.mxu0 %v475
        %v477 = vpop.f32.mrf.mxu0
        %v478 = vadd.f32 0.0, %v477
        %v479 = vpop.f32.mrf.mxu0
        %480 = vdwg.mxu0
        %481 = vmatprep.subr.mxu0 0.0
        %482 = vmatpush1.xpose.msra.mxu0 0.0
        %483 = vmatprep.subr.mxu0 0.0
        %484 = vmatpush1.xpose.msra.mxu0 0.0
        %485 = vmatprep.subr.mxu0 0.0
        %486 = vmatpush1.xpose.msra.mxu0 0.0
        %487 = vmatprep.subr.mxu0 0.0
        %488 = vmatpush1.xpose.msra.mxu0 0.0
        %489 = vmatprep.subr.mxu0 0.0
        %490 = vmatpush1.xpose.msra.mxu0 0.0
        %491 = vmatprep.subr.mxu0 0.0
        %492 = vmatpush1.xpose.msra.mxu0 0.0
        %493 = vmatprep.subr.mxu0 0.0
        %494 = vmatpush1.xpose.msra.mxu0 0.0
        %495 = vmatprep.subr.mxu0 0.0
        %496 = vmatpush1.xpose.msra.mxu0 0.0
        %497 = vmatprep.subr.mxu0 0.0
        %498 = vmatpush1.xpose.msra.mxu0 0.0
        %499 = vmatprep.subr.mxu0 0.0
        %500 = vmatpush1.xpose.msra.mxu0 0.0
        %501 = vmatprep.subr.mxu0 0.0
        %502 = vmatpush1.xpose.msra.mxu0 0.0
        %503 = vmatprep.subr.mxu0 0.0
        %504 = vmatpush1.xpose.msra.mxu0 0.0
        %505 = vmatprep.subr.mxu0 0.0
        %506 = vmatpush1.xpose.msra.mxu0 0.0
        %507 = vmatprep.subr.mxu0 0.0
        %508 = vmatpush1.xpose.msra.mxu0 0.0
        %509 = vmatprep.subr.mxu0 0.0
        %510 = vmatpush1.xpose.msra.mxu0 0.0
        %511 = vmatprep.subr.mxu0 0.0
        %v512 = vand.u32 %v403, 4294901760
        %v513 = vsub.f32 %v403, %v512
        %v514 = vand.u32 %v513, 4294901760
        %v515 = vsub.f32 %v513, %v514
        %v516 = vand.u32 %v515, 4294901760
        %517 = vmatpush1.xpose.msra.mxu0 %v516
        %518 = vmatprep.subr.mxu0 0.0
        %519 = vmatpush2.xpose.msra.mxu0 0.0
        %520 = vmatprep.subr.mxu0 0.0
        %521 = vmatpush2.xpose.msra.mxu0 0.0
        %522 = vmatprep.subr.mxu0 0.0
        %523 = vmatpush2.xpose.msra.mxu0 0.0
        %524 = vmatprep.subr.mxu0 0.0
        %525 = vmatpush2.xpose.msra.mxu0 0.0
        %526 = vmatprep.subr.mxu0 0.0
        %527 = vmatpush2.xpose.msra.mxu0 0.0
        %528 = vmatprep.subr.mxu0 0.0
        %529 = vmatpush2.xpose.msra.mxu0 0.0
        %530 = vmatprep.subr.mxu0 0.0
        %531 = vmatpush2.xpose.msra.mxu0 0.0
        %532 = vmatprep.subr.mxu0 0.0
        %533 = vmatpush2.xpose.msra.mxu0 0.0
        %534 = vmatprep.subr.mxu0 0.0
        %535 = vmatpush2.xpose.msra.mxu0 0.0
        %536 = vmatprep.subr.mxu0 0.0
        %537 = vmatpush2.xpose.msra.mxu0 0.0
        %538 = vmatprep.subr.mxu0 0.0
        %539 = vmatpush2.xpose.msra.mxu0 0.0
        %540 = vmatprep.subr.mxu0 0.0
        %541 = vmatpush2.xpose.msra.mxu0 0.0
        %542 = vmatprep.subr.mxu0 0.0
        %543 = vmatpush2.xpose.msra.mxu0 0.0
        %544 = vmatprep.subr.mxu0 0.0
        %545 = vmatpush2.xpose.msra.mxu0 0.0
        %546 = vmatprep.subr.mxu0 0.0
        %547 = vmatpush2.xpose.msra.mxu0 0.0
        %548 = vmatprep.subr.mxu0 0.0
        %549 = vmatpush2.xpose.msra.mxu0 0.0
        %550 = vmatprep.mubr.f32.mxu0 0.0
        %v551 = vand.u32 %v400, 4294901760
        %552 = vmatmul.mubr.f32.gmra.mxu0 %v551
        %v553 = vpop.f32.mrf.mxu0
        %v554 = vadd.f32 %v478, %v553
        %v555 = vpop.f32.mrf.mxu0
        %556 = vdwg.mxu0
        %557 = vmatprep.subr.mxu0 0.0
        %558 = vmatpush1.xpose.msra.mxu0 0.0
        %559 = vmatprep.subr.mxu0 0.0
        %560 = vmatpush1.xpose.msra.mxu0 0.0
        %561 = vmatprep.subr.mxu0 0.0
        %562 = vmatpush1.xpose.msra.mxu0 0.0
        %563 = vmatprep.subr.mxu0 0.0
        %564 = vmatpush1.xpose.msra.mxu0 0.0
        %565 = vmatprep.subr.mxu0 0.0
        %566 = vmatpush1.xpose.msra.mxu0 0.0
        %567 = vmatprep.subr.mxu0 0.0
        %568 = vmatpush1.xpose.msra.mxu0 0.0
        %569 = vmatprep.subr.mxu0 0.0
        %570 = vmatpush1.xpose.msra.mxu0 0.0
        %571 = vmatprep.subr.mxu0 0.0
        %572 = vmatpush1.xpose.msra.mxu0 0.0
        %573 = vmatprep.subr.mxu0 0.0
        %574 = vmatpush1.xpose.msra.mxu0 0.0
        %575 = vmatprep.subr.mxu0 0.0
        %576 = vmatpush1.xpose.msra.mxu0 0.0
        %577 = vmatprep.subr.mxu0 0.0
        %578 = vmatpush1.xpose.msra.mxu0 0.0
        %579 = vmatprep.subr.mxu0 0.0
        %580 = vmatpush1.xpose.msra.mxu0 0.0
        %581 = vmatprep.subr.mxu0 0.0
        %582 = vmatpush1.xpose.msra.mxu0 0.0
        %583 = vmatprep.subr.mxu0 0.0
        %584 = vmatpush1.xpose.msra.mxu0 0.0
        %585 = vmatprep.subr.mxu0 0.0
        %586 = vmatpush1.xpose.msra.mxu0 0.0
        %587 = vmatprep.subr.mxu0 0.0
        %v588 = vand.u32 %v403, 4294901760
        %v589 = vsub.f32 %v403, %v588
        %590 = vmatpush1.xpose.msra.mxu0 %v589
        %591 = vmatprep.subr.mxu0 0.0
        %592 = vmatpush2.xpose.msra.mxu0 0.0
        %593 = vmatprep.subr.mxu0 0.0
        %594 = vmatpush2.xpose.msra.mxu0 0.0
        %595 = vmatprep.subr.mxu0 0.0
        %596 = vmatpush2.xpose.msra.mxu0 0.0
        %597 = vmatprep.subr.mxu0 0.0
        %598 = vmatpush2.xpose.msra.mxu0 0.0
        %599 = vmatprep.subr.mxu0 0.0
        %600 = vmatpush2.xpose.msra.mxu0 0.0
        %601 = vmatprep.subr.mxu0 0.0
        %602 = vmatpush2.xpose.msra.mxu0 0.0
        %603 = vmatprep.subr.mxu0 0.0
        %604 = vmatpush2.xpose.msra.mxu0 0.0
        %605 = vmatprep.subr.mxu0 0.0
        %606 = vmatpush2.xpose.msra.mxu0 0.0
        %607 = vmatprep.subr.mxu0 0.0
        %608 = vmatpush2.xpose.msra.mxu0 0.0
        %609 = vmatprep.subr.mxu0 0.0
        %610 = vmatpush2.xpose.msra.mxu0 0.0
        %611 = vmatprep.subr.mxu0 0.0
        %612 = vmatpush2.xpose.msra.mxu0 0.0
        %613 = vmatprep.subr.mxu0 0.0
        %614 = vmatpush2.xpose.msra.mxu0 0.0
        %615 = vmatprep.subr.mxu0 0.0
        %616 = vmatpush2.xpose.msra.mxu0 0.0
        %617 = vmatprep.subr.mxu0 0.0
        %618 = vmatpush2.xpose.msra.mxu0 0.0
        %619 = vmatprep.subr.mxu0 0.0
        %620 = vmatpush2.xpose.msra.mxu0 0.0
        %621 = vmatprep.subr.mxu0 0.0
        %622 = vmatpush2.xpose.msra.mxu0 0.0
        %623 = vmatprep.mubr.f32.mxu0 0.0
        %v624 = vand.u32 %v400, 4294901760
        %v625 = vsub.f32 %v400, %v624
        %626 = vmatmul.mubr.f32.gmra.mxu0 %v625
        %v627 = vpop.f32.mrf.mxu0
        %v628 = vadd.f32 %v554, %v627
        %v629 = vpop.f32.mrf.mxu0
        %630 = vdwg.mxu0
        %631 = vmatprep.subr.mxu0 0.0
        %632 = vmatpush1.xpose.msra.mxu0 0.0
        %633 = vmatprep.subr.mxu0 0.0
        %634 = vmatpush1.xpose.msra.mxu0 0.0
        %635 = vmatprep.subr.mxu0 0.0
        %636 = vmatpush1.xpose.msra.mxu0 0.0
        %637 = vmatprep.subr.mxu0 0.0
        %638 = vmatpush1.xpose.msra.mxu0 0.0
        %639 = vmatprep.subr.mxu0 0.0
        %640 = vmatpush1.xpose.msra.mxu0 0.0
        %641 = vmatprep.subr.mxu0 0.0
        %642 = vmatpush1.xpose.msra.mxu0 0.0
        %643 = vmatprep.subr.mxu0 0.0
        %644 = vmatpush1.xpose.msra.mxu0 0.0
        %645 = vmatprep.subr.mxu0 0.0
        %646 = vmatpush1.xpose.msra.mxu0 0.0
        %647 = vmatprep.subr.mxu0 0.0
        %648 = vmatpush1.xpose.msra.mxu0 0.0
        %649 = vmatprep.subr.mxu0 0.0
        %650 = vmatpush1.xpose.msra.mxu0 0.0
        %651 = vmatprep.subr.mxu0 0.0
        %652 = vmatpush1.xpose.msra.mxu0 0.0
        %653 = vmatprep.subr.mxu0 0.0
        %654 = vmatpush1.xpose.msra.mxu0 0.0
        %655 = vmatprep.subr.mxu0 0.0
        %656 = vmatpush1.xpose.msra.mxu0 0.0
        %657 = vmatprep.subr.mxu0 0.0
        %658 = vmatpush1.xpose.msra.mxu0 0.0
        %659 = vmatprep.subr.mxu0 0.0
        %660 = vmatpush1.xpose.msra.mxu0 0.0
        %661 = vmatprep.subr.mxu0 0.0
        %v662 = vand.u32 %v403, 4294901760
        %663 = vmatpush1.xpose.msra.mxu0 %v662
        %664 = vmatprep.subr.mxu0 0.0
        %665 = vmatpush2.xpose.msra.mxu0 0.0
        %666 = vmatprep.subr.mxu0 0.0
        %667 = vmatpush2.xpose.msra.mxu0 0.0
        %668 = vmatprep.subr.mxu0 0.0
        %669 = vmatpush2.xpose.msra.mxu0 0.0
        %670 = vmatprep.subr.mxu0 0.0
        %671 = vmatpush2.xpose.msra.mxu0 0.0
        %672 = vmatprep.subr.mxu0 0.0
        %673 = vmatpush2.xpose.msra.mxu0 0.0
        %674 = vmatprep.subr.mxu0 0.0
        %675 = vmatpush2.xpose.msra.mxu0 0.0
        %676 = vmatprep.subr.mxu0 0.0
        %677 = vmatpush2.xpose.msra.mxu0 0.0
        %678 = vmatprep.subr.mxu0 0.0
        %679 = vmatpush2.xpose.msra.mxu0 0.0
        %680 = vmatprep.subr.mxu0 0.0
        %681 = vmatpush2.xpose.msra.mxu0 0.0
        %682 = vmatprep.subr.mxu0 0.0
        %683 = vmatpush2.xpose.msra.mxu0 0.0
        %684 = vmatprep.subr.mxu0 0.0
        %685 = vmatpush2.xpose.msra.mxu0 0.0
        %686 = vmatprep.subr.mxu0 0.0
        %687 = vmatpush2.xpose.msra.mxu0 0.0
        %688 = vmatprep.subr.mxu0 0.0
        %689 = vmatpush2.xpose.msra.mxu0 0.0
        %690 = vmatprep.subr.mxu0 0.0
        %691 = vmatpush2.xpose.msra.mxu0 0.0
        %692 = vmatprep.subr.mxu0 0.0
        %693 = vmatpush2.xpose.msra.mxu0 0.0
        %694 = vmatprep.subr.mxu0 0.0
        %695 = vmatpush2.xpose.msra.mxu0 0.0
        %696 = vmatprep.mubr.f32.mxu0 0.0
        %v697 = vand.u32 %v400, 4294901760
        %v698 = vsub.f32 %v400, %v697
        %v699 = vand.u32 %v698, 4294901760
        %700 = vmatmul.mubr.f32.gmra.mxu0 %v699
        %v701 = vpop.f32.mrf.mxu0
        %v702 = vadd.f32 %v628, %v701
        %v703 = vpop.f32.mrf.mxu0
        %704 = vdwg.mxu0
        %705 = vmatprep.subr.mxu0 0.0
        %706 = vmatpush1.xpose.msra.mxu0 0.0
        %707 = vmatprep.subr.mxu0 0.0
        %708 = vmatpush1.xpose.msra.mxu0 0.0
        %709 = vmatprep.subr.mxu0 0.0
        %710 = vmatpush1.xpose.msra.mxu0 0.0
        %711 = vmatprep.subr.mxu0 0.0
        %712 = vmatpush1.xpose.msra.mxu0 0.0
        %713 = vmatprep.subr.mxu0 0.0
        %714 = vmatpush1.xpose.msra.mxu0 0.0
        %715 = vmatprep.subr.mxu0 0.0
        %716 = vmatpush1.xpose.msra.mxu0 0.0
        %717 = vmatprep.subr.mxu0 0.0
        %718 = vmatpush1.xpose.msra.mxu0 0.0
        %719 = vmatprep.subr.mxu0 0.0
        %720 = vmatpush1.xpose.msra.mxu0 0.0
        %721 = vmatprep.subr.mxu0 0.0
        %722 = vmatpush1.xpose.msra.mxu0 0.0
        %723 = vmatprep.subr.mxu0 0.0
        %724 = vmatpush1.xpose.msra.mxu0 0.0
        %725 = vmatprep.subr.mxu0 0.0
        %726 = vmatpush1.xpose.msra.mxu0 0.0
        %727 = vmatprep.subr.mxu0 0.0
        %728 = vmatpush1.xpose.msra.mxu0 0.0
        %729 = vmatprep.subr.mxu0 0.0
        %730 = vmatpush1.xpose.msra.mxu0 0.0
        %731 = vmatprep.subr.mxu0 0.0
        %732 = vmatpush1.xpose.msra.mxu0 0.0
        %733 = vmatprep.subr.mxu0 0.0
        %734 = vmatpush1.xpose.msra.mxu0 0.0
        %735 = vmatprep.subr.mxu0 0.0
        %v736 = vand.u32 %v403, 4294901760
        %v737 = vsub.f32 %v403, %v736
        %v738 = vand.u32 %v737, 4294901760
        %739 = vmatpush1.xpose.msra.mxu0 %v738
        %740 = vmatprep.subr.mxu0 0.0
        %741 = vmatpush2.xpose.msra.mxu0 0.0
        %742 = vmatprep.subr.mxu0 0.0
        %743 = vmatpush2.xpose.msra.mxu0 0.0
        %744 = vmatprep.subr.mxu0 0.0
        %745 = vmatpush2.xpose.msra.mxu0 0.0
        %746 = vmatprep.subr.mxu0 0.0
        %747 = vmatpush2.xpose.msra.mxu0 0.0
        %748 = vmatprep.subr.mxu0 0.0
        %749 = vmatpush2.xpose.msra.mxu0 0.0
        %750 = vmatprep.subr.mxu0 0.0
        %751 = vmatpush2.xpose.msra.mxu0 0.0
        %752 = vmatprep.subr.mxu0 0.0
        %753 = vmatpush2.xpose.msra.mxu0 0.0
        %754 = vmatprep.subr.mxu0 0.0
        %755 = vmatpush2.xpose.msra.mxu0 0.0
        %756 = vmatprep.subr.mxu0 0.0
        %757 = vmatpush2.xpose.msra.mxu0 0.0
        %758 = vmatprep.subr.mxu0 0.0
        %759 = vmatpush2.xpose.msra.mxu0 0.0
        %760 = vmatprep.subr.mxu0 0.0
        %761 = vmatpush2.xpose.msra.mxu0 0.0
        %762 = vmatprep.subr.mxu0 0.0
        %763 = vmatpush2.xpose.msra.mxu0 0.0
        %764 = vmatprep.subr.mxu0 0.0
        %765 = vmatpush2.xpose.msra.mxu0 0.0
        %766 = vmatprep.subr.mxu0 0.0
        %767 = vmatpush2.xpose.msra.mxu0 0.0
        %768 = vmatprep.subr.mxu0 0.0
        %769 = vmatpush2.xpose.msra.mxu0 0.0
        %770 = vmatprep.subr.mxu0 0.0
        %771 = vmatpush2.xpose.msra.mxu0 0.0
        %772 = vmatprep.mubr.f32.mxu0 0.0
        %v773 = vand.u32 %v400, 4294901760
        %774 = vmatmul.mubr.f32.gmra.mxu0 %v773
        %v775 = vpop.f32.mrf.mxu0
        %v776 = vadd.f32 %v702, %v775
        %v777 = vpop.f32.mrf.mxu0
        %778 = vdwg.mxu0
        %779 = vmatprep.subr.mxu0 0.0
        %780 = vmatpush1.xpose.msra.mxu0 0.0
        %781 = vmatprep.subr.mxu0 0.0
        %782 = vmatpush1.xpose.msra.mxu0 0.0
        %783 = vmatprep.subr.mxu0 0.0
        %784 = vmatpush1.xpose.msra.mxu0 0.0
        %785 = vmatprep.subr.mxu0 0.0
        %786 = vmatpush1.xpose.msra.mxu0 0.0
        %787 = vmatprep.subr.mxu0 0.0
        %788 = vmatpush1.xpose.msra.mxu0 0.0
        %789 = vmatprep.subr.mxu0 0.0
        %790 = vmatpush1.xpose.msra.mxu0 0.0
        %791 = vmatprep.subr.mxu0 0.0
        %792 = vmatpush1.xpose.msra.mxu0 0.0
        %793 = vmatprep.subr.mxu0 0.0
        %794 = vmatpush1.xpose.msra.mxu0 0.0
        %795 = vmatprep.subr.mxu0 0.0
        %796 = vmatpush1.xpose.msra.mxu0 0.0
        %797 = vmatprep.subr.mxu0 0.0
        %798 = vmatpush1.xpose.msra.mxu0 0.0
        %799 = vmatprep.subr.mxu0 0.0
        %800 = vmatpush1.xpose.msra.mxu0 0.0
        %801 = vmatprep.subr.mxu0 0.0
        %802 = vmatpush1.xpose.msra.mxu0 0.0
        %803 = vmatprep.subr.mxu0 0.0
        %804 = vmatpush1.xpose.msra.mxu0 0.0
        %805 = vmatprep.subr.mxu0 0.0
        %806 = vmatpush1.xpose.msra.mxu0 0.0
        %807 = vmatprep.subr.mxu0 0.0
        %808 = vmatpush1.xpose.msra.mxu0 0.0
        %809 = vmatprep.subr.mxu0 0.0
        %v810 = vand.u32 %v403, 4294901760
        %811 = vmatpush1.xpose.msra.mxu0 %v810
        %812 = vmatprep.subr.mxu0 0.0
        %813 = vmatpush2.xpose.msra.mxu0 0.0
        %814 = vmatprep.subr.mxu0 0.0
        %815 = vmatpush2.xpose.msra.mxu0 0.0
        %816 = vmatprep.subr.mxu0 0.0
        %817 = vmatpush2.xpose.msra.mxu0 0.0
        %818 = vmatprep.subr.mxu0 0.0
        %819 = vmatpush2.xpose.msra.mxu0 0.0
        %820 = vmatprep.subr.mxu0 0.0
        %821 = vmatpush2.xpose.msra.mxu0 0.0
        %822 = vmatprep.subr.mxu0 0.0
        %823 = vmatpush2.xpose.msra.mxu0 0.0
        %824 = vmatprep.subr.mxu0 0.0
        %825 = vmatpush2.xpose.msra.mxu0 0.0
        %826 = vmatprep.subr.mxu0 0.0
        %827 = vmatpush2.xpose.msra.mxu0 0.0
        %828 = vmatprep.subr.mxu0 0.0
        %829 = vmatpush2.xpose.msra.mxu0 0.0
        %830 = vmatprep.subr.mxu0 0.0
        %831 = vmatpush2.xpose.msra.mxu0 0.0
        %832 = vmatprep.subr.mxu0 0.0
        %833 = vmatpush2.xpose.msra.mxu0 0.0
        %834 = vmatprep.subr.mxu0 0.0
        %835 = vmatpush2.xpose.msra.mxu0 0.0
        %836 = vmatprep.subr.mxu0 0.0
        %837 = vmatpush2.xpose.msra.mxu0 0.0
        %838 = vmatprep.subr.mxu0 0.0
        %839 = vmatpush2.xpose.msra.mxu0 0.0
        %840 = vmatprep.subr.mxu0 0.0
        %841 = vmatpush2.xpose.msra.mxu0 0.0
        %842 = vmatprep.subr.mxu0 0.0
        %843 = vmatpush2.xpose.msra.mxu0 0.0
        %844 = vmatprep.mubr.f32.mxu0 0.0
        %v845 = vand.u32 %v400, 4294901760
        %846 = vmatmul.mubr.f32.gmra.mxu0 %v845
        %v847 = vpop.f32.mrf.mxu0
        %v848 = vadd.f32 %v776, %v847
        %v849 = vpop.f32.mrf.mxu0
        %850 = vdwg.mxu0
        %v852 = vsel %vm398, %v395, 0
        %v855 = vsel %vm398, %v397, 0
        %857 = vmatprep.subr.mxu0 0.0
        %858 = vmatpush1.xpose.msra.mxu0 0.0
        %859 = vmatprep.subr.mxu0 0.0
        %860 = vmatpush1.xpose.msra.mxu0 0.0
        %861 = vmatprep.subr.mxu0 0.0
        %862 = vmatpush1.xpose.msra.mxu0 0.0
        %863 = vmatprep.subr.mxu0 0.0
        %864 = vmatpush1.xpose.msra.mxu0 0.0
        %865 = vmatprep.subr.mxu0 0.0
        %866 = vmatpush1.xpose.msra.mxu0 0.0
        %867 = vmatprep.subr.mxu0 0.0
        %868 = vmatpush1.xpose.msra.mxu0 0.0
        %869 = vmatprep.subr.mxu0 0.0
        %870 = vmatpush1.xpose.msra.mxu0 0.0
        %871 = vmatprep.subr.mxu0 0.0
        %872 = vmatpush1.xpose.msra.mxu0 0.0
        %873 = vmatprep.subr.mxu0 0.0
        %874 = vmatpush1.xpose.msra.mxu0 0.0
        %875 = vmatprep.subr.mxu0 0.0
        %876 = vmatpush1.xpose.msra.mxu0 0.0
        %877 = vmatprep.subr.mxu0 0.0
        %878 = vmatpush1.xpose.msra.mxu0 0.0
        %879 = vmatprep.subr.mxu0 0.0
        %880 = vmatpush1.xpose.msra.mxu0 0.0
        %881 = vmatprep.subr.mxu0 0.0
        %882 = vmatpush1.xpose.msra.mxu0 0.0
        %883 = vmatprep.subr.mxu0 0.0
        %884 = vmatpush1.xpose.msra.mxu0 0.0
        %885 = vmatprep.subr.mxu0 0.0
        %886 = vmatpush1.xpose.msra.mxu0 0.0
        %887 = vmatprep.subr.mxu0 0.0
        %v888 = vand.u32 %v855, 4294901760
        %889 = vmatpush1.xpose.msra.mxu0 %v888
        %890 = vmatprep.subr.mxu0 0.0
        %891 = vmatpush2.xpose.msra.mxu0 0.0
        %892 = vmatprep.subr.mxu0 0.0
        %893 = vmatpush2.xpose.msra.mxu0 0.0
        %894 = vmatprep.subr.mxu0 0.0
        %895 = vmatpush2.xpose.msra.mxu0 0.0
        %896 = vmatprep.subr.mxu0 0.0
        %897 = vmatpush2.xpose.msra.mxu0 0.0
        %898 = vmatprep.subr.mxu0 0.0
        %899 = vmatpush2.xpose.msra.mxu0 0.0
        %900 = vmatprep.subr.mxu0 0.0
        %901 = vmatpush2.xpose.msra.mxu0 0.0
        %902 = vmatprep.subr.mxu0 0.0
        %903 = vmatpush2.xpose.msra.mxu0 0.0
        %904 = vmatprep.subr.mxu0 0.0
        %905 = vmatpush2.xpose.msra.mxu0 0.0
        %906 = vmatprep.subr.mxu0 0.0
        %907 = vmatpush2.xpose.msra.mxu0 0.0
        %908 = vmatprep.subr.mxu0 0.0
        %909 = vmatpush2.xpose.msra.mxu0 0.0
        %910 = vmatprep.subr.mxu0 0.0
        %911 = vmatpush2.xpose.msra.mxu0 0.0
        %912 = vmatprep.subr.mxu0 0.0
        %913 = vmatpush2.xpose.msra.mxu0 0.0
        %914 = vmatprep.subr.mxu0 0.0
        %915 = vmatpush2.xpose.msra.mxu0 0.0
        %916 = vmatprep.subr.mxu0 0.0
        %917 = vmatpush2.xpose.msra.mxu0 0.0
        %918 = vmatprep.subr.mxu0 0.0
        %919 = vmatpush2.xpose.msra.mxu0 0.0
        %920 = vmatprep.subr.mxu0 0.0
        %921 = vmatpush2.xpose.msra.mxu0 0.0
        %922 = vmatprep.mubr.f32.mxu0 0.0
        %v923 = vand.u32 %v852, 4294901760
        %v924 = vsub.f32 %v852, %v923
        %v925 = vand.u32 %v924, 4294901760
        %v926 = vsub.f32 %v924, %v925
        %v927 = vand.u32 %v926, 4294901760
        %928 = vmatmul.mubr.f32.gmra.mxu0 %v927
        %v929 = vpop.f32.mrf.mxu0
        %v930 = vadd.f32 0.0, %v929
        %v931 = vpop.f32.mrf.mxu0
        %932 = vdwg.mxu0
        %933 = vmatprep.subr.mxu0 0.0
        %934 = vmatpush1.xpose.msra.mxu0 0.0
        %935 = vmatprep.subr.mxu0 0.0
        %936 = vmatpush1.xpose.msra.mxu0 0.0
        %937 = vmatprep.subr.mxu0 0.0
        %938 = vmatpush1.xpose.msra.mxu0 0.0
        %939 = vmatprep.subr.mxu0 0.0
        %940 = vmatpush1.xpose.msra.mxu0 0.0
        %941 = vmatprep.subr.mxu0 0.0
        %942 = vmatpush1.xpose.msra.mxu0 0.0
        %943 = vmatprep.subr.mxu0 0.0
        %944 = vmatpush1.xpose.msra.mxu0 0.0
        %945 = vmatprep.subr.mxu0 0.0
        %946 = vmatpush1.xpose.msra.mxu0 0.0
        %947 = vmatprep.subr.mxu0 0.0
        %948 = vmatpush1.xpose.msra.mxu0 0.0
        %949 = vmatprep.subr.mxu0 0.0
        %950 = vmatpush1.xpose.msra.mxu0 0.0
        %951 = vmatprep.subr.mxu0 0.0
        %952 = vmatpush1.xpose.msra.mxu0 0.0
        %953 = vmatprep.subr.mxu0 0.0
        %954 = vmatpush1.xpose.msra.mxu0 0.0
        %955 = vmatprep.subr.mxu0 0.0
        %956 = vmatpush1.xpose.msra.mxu0 0.0
        %957 = vmatprep.subr.mxu0 0.0
        %958 = vmatpush1.xpose.msra.mxu0 0.0
        %959 = vmatprep.subr.mxu0 0.0
        %960 = vmatpush1.xpose.msra.mxu0 0.0
        %961 = vmatprep.subr.mxu0 0.0
        %962 = vmatpush1.xpose.msra.mxu0 0.0
        %963 = vmatprep.subr.mxu0 0.0
        %v964 = vand.u32 %v855, 4294901760
        %v965 = vsub.f32 %v855, %v964
        %v966 = vand.u32 %v965, 4294901760
        %v967 = vsub.f32 %v965, %v966
        %v968 = vand.u32 %v967, 4294901760
        %969 = vmatpush1.xpose.msra.mxu0 %v968
        %970 = vmatprep.subr.mxu0 0.0
        %971 = vmatpush2.xpose.msra.mxu0 0.0
        %972 = vmatprep.subr.mxu0 0.0
        %973 = vmatpush2.xpose.msra.mxu0 0.0
        %974 = vmatprep.subr.mxu0 0.0
        %975 = vmatpush2.xpose.msra.mxu0 0.0
        %976 = vmatprep.subr.mxu0 0.0
        %977 = vmatpush2.xpose.msra.mxu0 0.0
        %978 = vmatprep.subr.mxu0 0.0
        %979 = vmatpush2.xpose.msra.mxu0 0.0
        %980 = vmatprep.subr.mxu0 0.0
        %981 = vmatpush2.xpose.msra.mxu0 0.0
        %982 = vmatprep.subr.mxu0 0.0
        %983 = vmatpush2.xpose.msra.mxu0 0.0
        %984 = vmatprep.subr.mxu0 0.0
        %985 = vmatpush2.xpose.msra.mxu0 0.0
        %986 = vmatprep.subr.mxu0 0.0
        %987 = vmatpush2.xpose.msra.mxu0 0.0
        %988 = vmatprep.subr.mxu0 0.0
        %989 = vmatpush2.xpose.msra.mxu0 0.0
        %990 = vmatprep.subr.mxu0 0.0
        %991 = vmatpush2.xpose.msra.mxu0 0.0
        %992 = vmatprep.subr.mxu0 0.0
        %993 = vmatpush2.xpose.msra.mxu0 0.0
        %994 = vmatprep.subr.mxu0 0.0
        %995 = vmatpush2.xpose.msra.mxu0 0.0
        %996 = vmatprep.subr.mxu0 0.0
        %997 = vmatpush2.xpose.msra.mxu0 0.0
        %998 = vmatprep.subr.mxu0 0.0
        %999 = vmatpush2.xpose.msra.mxu0 0.0
        %1000 = vmatprep.subr.mxu0 0.0
        %1001 = vmatpush2.xpose.msra.mxu0 0.0
        %1002 = vmatprep.mubr.f32.mxu0 0.0
        %v1003 = vand.u32 %v852, 4294901760
        %1004 = vmatmul.mubr.f32.gmra.mxu0 %v1003
        %v1005 = vpop.f32.mrf.mxu0
        %v1006 = vadd.f32 %v930, %v1005
        %v1007 = vpop.f32.mrf.mxu0
        %1008 = vdwg.mxu0
        %1009 = vmatprep.subr.mxu0 0.0
        %1010 = vmatpush1.xpose.msra.mxu0 0.0
        %1011 = vmatprep.subr.mxu0 0.0
        %1012 = vmatpush1.xpose.msra.mxu0 0.0
        %1013 = vmatprep.subr.mxu0 0.0
        %1014 = vmatpush1.xpose.msra.mxu0 0.0
        %1015 = vmatprep.subr.mxu0 0.0
        %1016 = vmatpush1.xpose.msra.mxu0 0.0
        %1017 = vmatprep.subr.mxu0 0.0
        %1018 = vmatpush1.xpose.msra.mxu0 0.0
        %1019 = vmatprep.subr.mxu0 0.0
        %1020 = vmatpush1.xpose.msra.mxu0 0.0
        %1021 = vmatprep.subr.mxu0 0.0
        %1022 = vmatpush1.xpose.msra.mxu0 0.0
        %1023 = vmatprep.subr.mxu0 0.0
        %1024 = vmatpush1.xpose.msra.mxu0 0.0
        %1025 = vmatprep.subr.mxu0 0.0
        %1026 = vmatpush1.xpose.msra.mxu0 0.0
        %1027 = vmatprep.subr.mxu0 0.0
        %1028 = vmatpush1.xpose.msra.mxu0 0.0
        %1029 = vmatprep.subr.mxu0 0.0
        %1030 = vmatpush1.xpose.msra.mxu0 0.0
        %1031 = vmatprep.subr.mxu0 0.0
        %1032 = vmatpush1.xpose.msra.mxu0 0.0
        %1033 = vmatprep.subr.mxu0 0.0
        %1034 = vmatpush1.xpose.msra.mxu0 0.0
        %1035 = vmatprep.subr.mxu0 0.0
        %1036 = vmatpush1.xpose.msra.mxu0 0.0
        %1037 = vmatprep.subr.mxu0 0.0
        %1038 = vmatpush1.xpose.msra.mxu0 0.0
        %1039 = vmatprep.subr.mxu0 0.0
        %v1040 = vand.u32 %v855, 4294901760
        %v1041 = vsub.f32 %v855, %v1040
        %1042 = vmatpush1.xpose.msra.mxu0 %v1041
        %1043 = vmatprep.subr.mxu0 0.0
        %1044 = vmatpush2.xpose.msra.mxu0 0.0
        %1045 = vmatprep.subr.mxu0 0.0
        %1046 = vmatpush2.xpose.msra.mxu0 0.0
        %1047 = vmatprep.subr.mxu0 0.0
        %1048 = vmatpush2.xpose.msra.mxu0 0.0
        %1049 = vmatprep.subr.mxu0 0.0
        %1050 = vmatpush2.xpose.msra.mxu0 0.0
        %1051 = vmatprep.subr.mxu0 0.0
        %1052 = vmatpush2.xpose.msra.mxu0 0.0
        %1053 = vmatprep.subr.mxu0 0.0
        %1054 = vmatpush2.xpose.msra.mxu0 0.0
        %1055 = vmatprep.subr.mxu0 0.0
        %1056 = vmatpush2.xpose.msra.mxu0 0.0
        %1057 = vmatprep.subr.mxu0 0.0
        %1058 = vmatpush2.xpose.msra.mxu0 0.0
        %1059 = vmatprep.subr.mxu0 0.0
        %1060 = vmatpush2.xpose.msra.mxu0 0.0
        %1061 = vmatprep.subr.mxu0 0.0
        %1062 = vmatpush2.xpose.msra.mxu0 0.0
        %1063 = vmatprep.subr.mxu0 0.0
        %1064 = vmatpush2.xpose.msra.mxu0 0.0
        %1065 = vmatprep.subr.mxu0 0.0
        %1066 = vmatpush2.xpose.msra.mxu0 0.0
        %1067 = vmatprep.subr.mxu0 0.0
        %1068 = vmatpush2.xpose.msra.mxu0 0.0
        %1069 = vmatprep.subr.mxu0 0.0
        %1070 = vmatpush2.xpose.msra.mxu0 0.0
        %1071 = vmatprep.subr.mxu0 0.0
        %1072 = vmatpush2.xpose.msra.mxu0 0.0
        %1073 = vmatprep.subr.mxu0 0.0
        %1074 = vmatpush2.xpose.msra.mxu0 0.0
        %1075 = vmatprep.mubr.f32.mxu0 0.0
        %v1076 = vand.u32 %v852, 4294901760
        %v1077 = vsub.f32 %v852, %v1076
        %1078 = vmatmul.mubr.f32.gmra.mxu0 %v1077
        %v1079 = vpop.f32.mrf.mxu0
        %v1080 = vadd.f32 %v1006, %v1079
        %v1081 = vpop.f32.mrf.mxu0
        %1082 = vdwg.mxu0
        %1083 = vmatprep.subr.mxu0 0.0
        %1084 = vmatpush1.xpose.msra.mxu0 0.0
        %1085 = vmatprep.subr.mxu0 0.0
        %1086 = vmatpush1.xpose.msra.mxu0 0.0
        %1087 = vmatprep.subr.mxu0 0.0
        %1088 = vmatpush1.xpose.msra.mxu0 0.0
        %1089 = vmatprep.subr.mxu0 0.0
        %1090 = vmatpush1.xpose.msra.mxu0 0.0
        %1091 = vmatprep.subr.mxu0 0.0
        %1092 = vmatpush1.xpose.msra.mxu0 0.0
        %1093 = vmatprep.subr.mxu0 0.0
        %1094 = vmatpush1.xpose.msra.mxu0 0.0
        %1095 = vmatprep.subr.mxu0 0.0
        %1096 = vmatpush1.xpose.msra.mxu0 0.0
        %1097 = vmatprep.subr.mxu0 0.0
        %1098 = vmatpush1.xpose.msra.mxu0 0.0
        %1099 = vmatprep.subr.mxu0 0.0
        %1100 = vmatpush1.xpose.msra.mxu0 0.0
        %1101 = vmatprep.subr.mxu0 0.0
        %1102 = vmatpush1.xpose.msra.mxu0 0.0
        %1103 = vmatprep.subr.mxu0 0.0
        %1104 = vmatpush1.xpose.msra.mxu0 0.0
        %1105 = vmatprep.subr.mxu0 0.0
        %1106 = vmatpush1.xpose.msra.mxu0 0.0
        %1107 = vmatprep.subr.mxu0 0.0
        %1108 = vmatpush1.xpose.msra.mxu0 0.0
        %1109 = vmatprep.subr.mxu0 0.0
        %1110 = vmatpush1.xpose.msra.mxu0 0.0
        %1111 = vmatprep.subr.mxu0 0.0
        %1112 = vmatpush1.xpose.msra.mxu0 0.0
        %1113 = vmatprep.subr.mxu0 0.0
        %v1114 = vand.u32 %v855, 4294901760
        %1115 = vmatpush1.xpose.msra.mxu0 %v1114
        %1116 = vmatprep.subr.mxu0 0.0
        %1117 = vmatpush2.xpose.msra.mxu0 0.0
        %1118 = vmatprep.subr.mxu0 0.0
        %1119 = vmatpush2.xpose.msra.mxu0 0.0
        %1120 = vmatprep.subr.mxu0 0.0
        %1121 = vmatpush2.xpose.msra.mxu0 0.0
        %1122 = vmatprep.subr.mxu0 0.0
        %1123 = vmatpush2.xpose.msra.mxu0 0.0
        %1124 = vmatprep.subr.mxu0 0.0
        %1125 = vmatpush2.xpose.msra.mxu0 0.0
        %1126 = vmatprep.subr.mxu0 0.0
        %1127 = vmatpush2.xpose.msra.mxu0 0.0
        %1128 = vmatprep.subr.mxu0 0.0
        %1129 = vmatpush2.xpose.msra.mxu0 0.0
        %1130 = vmatprep.subr.mxu0 0.0
        %1131 = vmatpush2.xpose.msra.mxu0 0.0
        %1132 = vmatprep.subr.mxu0 0.0
        %1133 = vmatpush2.xpose.msra.mxu0 0.0
        %1134 = vmatprep.subr.mxu0 0.0
        %1135 = vmatpush2.xpose.msra.mxu0 0.0
        %1136 = vmatprep.subr.mxu0 0.0
        %1137 = vmatpush2.xpose.msra.mxu0 0.0
        %1138 = vmatprep.subr.mxu0 0.0
        %1139 = vmatpush2.xpose.msra.mxu0 0.0
        %1140 = vmatprep.subr.mxu0 0.0
        %1141 = vmatpush2.xpose.msra.mxu0 0.0
        %1142 = vmatprep.subr.mxu0 0.0
        %1143 = vmatpush2.xpose.msra.mxu0 0.0
        %1144 = vmatprep.subr.mxu0 0.0
        %1145 = vmatpush2.xpose.msra.mxu0 0.0
        %1146 = vmatprep.subr.mxu0 0.0
        %1147 = vmatpush2.xpose.msra.mxu0 0.0
        %1148 = vmatprep.mubr.f32.mxu0 0.0
        %v1149 = vand.u32 %v852, 4294901760
        %v1150 = vsub.f32 %v852, %v1149
        %v1151 = vand.u32 %v1150, 4294901760
        %1152 = vmatmul.mubr.f32.gmra.mxu0 %v1151
        %v1153 = vpop.f32.mrf.mxu0
        %v1154 = vadd.f32 %v1080, %v1153
        %v1155 = vpop.f32.mrf.mxu0
        %1156 = vdwg.mxu0
        %1157 = vmatprep.subr.mxu0 0.0
        %1158 = vmatpush1.xpose.msra.mxu0 0.0
        %1159 = vmatprep.subr.mxu0 0.0
        %1160 = vmatpush1.xpose.msra.mxu0 0.0
        %1161 = vmatprep.subr.mxu0 0.0
        %1162 = vmatpush1.xpose.msra.mxu0 0.0
        %1163 = vmatprep.subr.mxu0 0.0
        %1164 = vmatpush1.xpose.msra.mxu0 0.0
        %1165 = vmatprep.subr.mxu0 0.0
        %1166 = vmatpush1.xpose.msra.mxu0 0.0
        %1167 = vmatprep.subr.mxu0 0.0
        %1168 = vmatpush1.xpose.msra.mxu0 0.0
        %1169 = vmatprep.subr.mxu0 0.0
        %1170 = vmatpush1.xpose.msra.mxu0 0.0
        %1171 = vmatprep.subr.mxu0 0.0
        %1172 = vmatpush1.xpose.msra.mxu0 0.0
        %1173 = vmatprep.subr.mxu0 0.0
        %1174 = vmatpush1.xpose.msra.mxu0 0.0
        %1175 = vmatprep.subr.mxu0 0.0
        %1176 = vmatpush1.xpose.msra.mxu0 0.0
        %1177 = vmatprep.subr.mxu0 0.0
        %1178 = vmatpush1.xpose.msra.mxu0 0.0
        %1179 = vmatprep.subr.mxu0 0.0
        %1180 = vmatpush1.xpose.msra.mxu0 0.0
        %1181 = vmatprep.subr.mxu0 0.0
        %1182 = vmatpush1.xpose.msra.mxu0 0.0
        %1183 = vmatprep.subr.mxu0 0.0
        %1184 = vmatpush1.xpose.msra.mxu0 0.0
        %1185 = vmatprep.subr.mxu0 0.0
        %1186 = vmatpush1.xpose.msra.mxu0 0.0
        %1187 = vmatprep.subr.mxu0 0.0
        %v1188 = vand.u32 %v855, 4294901760
        %v1189 = vsub.f32 %v855, %v1188
        %v1190 = vand.u32 %v1189, 4294901760
        %1191 = vmatpush1.xpose.msra.mxu0 %v1190
        %1192 = vmatprep.subr.mxu0 0.0
        %1193 = vmatpush2.xpose.msra.mxu0 0.0
        %1194 = vmatprep.subr.mxu0 0.0
        %1195 = vmatpush2.xpose.msra.mxu0 0.0
        %1196 = vmatprep.subr.mxu0 0.0
        %1197 = vmatpush2.xpose.msra.mxu0 0.0
        %1198 = vmatprep.subr.mxu0 0.0
        %1199 = vmatpush2.xpose.msra.mxu0 0.0
        %1200 = vmatprep.subr.mxu0 0.0
        %1201 = vmatpush2.xpose.msra.mxu0 0.0
        %1202 = vmatprep.subr.mxu0 0.0
        %1203 = vmatpush2.xpose.msra.mxu0 0.0
        %1204 = vmatprep.subr.mxu0 0.0
        %1205 = vmatpush2.xpose.msra.mxu0 0.0
        %1206 = vmatprep.subr.mxu0 0.0
        %1207 = vmatpush2.xpose.msra.mxu0 0.0
        %1208 = vmatprep.subr.mxu0 0.0
        %1209 = vmatpush2.xpose.msra.mxu0 0.0
        %1210 = vmatprep.subr.mxu0 0.0
        %1211 = vmatpush2.xpose.msra.mxu0 0.0
        %1212 = vmatprep.subr.mxu0 0.0
        %1213 = vmatpush2.xpose.msra.mxu0 0.0
        %1214 = vmatprep.subr.mxu0 0.0
        %1215 = vmatpush2.xpose.msra.mxu0 0.0
        %1216 = vmatprep.subr.mxu0 0.0
        %1217 = vmatpush2.xpose.msra.mxu0 0.0
        %1218 = vmatprep.subr.mxu0 0.0
        %1219 = vmatpush2.xpose.msra.mxu0 0.0
        %1220 = vmatprep.subr.mxu0 0.0
        %1221 = vmatpush2.xpose.msra.mxu0 0.0
        %1222 = vmatprep.subr.mxu0 0.0
        %1223 = vmatpush2.xpose.msra.mxu0 0.0
        %1224 = vmatprep.mubr.f32.mxu0 0.0
        %v1225 = vand.u32 %v852, 4294901760
        %1226 = vmatmul.mubr.f32.gmra.mxu0 %v1225
        %v1227 = vpop.f32.mrf.mxu0
        %v1228 = vadd.f32 %v1154, %v1227
        %v1229 = vpop.f32.mrf.mxu0
        %1230 = vdwg.mxu0
        %1231 = vmatprep.subr.mxu0 0.0
        %1232 = vmatpush1.xpose.msra.mxu0 0.0
        %1233 = vmatprep.subr.mxu0 0.0
        %1234 = vmatpush1.xpose.msra.mxu0 0.0
        %1235 = vmatprep.subr.mxu0 0.0
        %1236 = vmatpush1.xpose.msra.mxu0 0.0
        %1237 = vmatprep.subr.mxu0 0.0
        %1238 = vmatpush1.xpose.msra.mxu0 0.0
        %1239 = vmatprep.subr.mxu0 0.0
        %1240 = vmatpush1.xpose.msra.mxu0 0.0
        %1241 = vmatprep.subr.mxu0 0.0
        %1242 = vmatpush1.xpose.msra.mxu0 0.0
        %1243 = vmatprep.subr.mxu0 0.0
        %1244 = vmatpush1.xpose.msra.mxu0 0.0
        %1245 = vmatprep.subr.mxu0 0.0
        %1246 = vmatpush1.xpose.msra.mxu0 0.0
        %1247 = vmatprep.subr.mxu0 0.0
        %1248 = vmatpush1.xpose.msra.mxu0 0.0
        %1249 = vmatprep.subr.mxu0 0.0
        %1250 = vmatpush1.xpose.msra.mxu0 0.0
        %1251 = vmatprep.subr.mxu0 0.0
        %1252 = vmatpush1.xpose.msra.mxu0 0.0
        %1253 = vmatprep.subr.mxu0 0.0
        %1254 = vmatpush1.xpose.msra.mxu0 0.0
        %1255 = vmatprep.subr.mxu0 0.0
        %1256 = vmatpush1.xpose.msra.mxu0 0.0
        %1257 = vmatprep.subr.mxu0 0.0
        %1258 = vmatpush1.xpose.msra.mxu0 0.0
        %1259 = vmatprep.subr.mxu0 0.0
        %1260 = vmatpush1.xpose.msra.mxu0 0.0
        %1261 = vmatprep.subr.mxu0 0.0
        %v1262 = vand.u32 %v855, 4294901760
        %1263 = vmatpush1.xpose.msra.mxu0 %v1262
        %1264 = vmatprep.subr.mxu0 0.0
        %1265 = vmatpush2.xpose.msra.mxu0 0.0
        %1266 = vmatprep.subr.mxu0 0.0
        %1267 = vmatpush2.xpose.msra.mxu0 0.0
        %1268 = vmatprep.subr.mxu0 0.0
        %1269 = vmatpush2.xpose.msra.mxu0 0.0
        %1270 = vmatprep.subr.mxu0 0.0
        %1271 = vmatpush2.xpose.msra.mxu0 0.0
        %1272 = vmatprep.subr.mxu0 0.0
        %1273 = vmatpush2.xpose.msra.mxu0 0.0
        %1274 = vmatprep.subr.mxu0 0.0
        %1275 = vmatpush2.xpose.msra.mxu0 0.0
        %1276 = vmatprep.subr.mxu0 0.0
        %1277 = vmatpush2.xpose.msra.mxu0 0.0
        %1278 = vmatprep.subr.mxu0 0.0
        %1279 = vmatpush2.xpose.msra.mxu0 0.0
        %1280 = vmatprep.subr.mxu0 0.0
        %1281 = vmatpush2.xpose.msra.mxu0 0.0
        %1282 = vmatprep.subr.mxu0 0.0
        %1283 = vmatpush2.xpose.msra.mxu0 0.0
        %1284 = vmatprep.subr.mxu0 0.0
        %1285 = vmatpush2.xpose.msra.mxu0 0.0
        %1286 = vmatprep.subr.mxu0 0.0
        %1287 = vmatpush2.xpose.msra.mxu0 0.0
        %1288 = vmatprep.subr.mxu0 0.0
        %1289 = vmatpush2.xpose.msra.mxu0 0.0
        %1290 = vmatprep.subr.mxu0 0.0
        %1291 = vmatpush2.xpose.msra.mxu0 0.0
        %1292 = vmatprep.subr.mxu0 0.0
        %1293 = vmatpush2.xpose.msra.mxu0 0.0
        %1294 = vmatprep.subr.mxu0 0.0
        %1295 = vmatpush2.xpose.msra.mxu0 0.0
        %1296 = vmatprep.mubr.f32.mxu0 0.0
        %v1297 = vand.u32 %v852, 4294901760
        %1298 = vmatmul.mubr.f32.gmra.mxu0 %v1297
        %v1299 = vpop.f32.mrf.mxu0
        %v1300 = vadd.f32 %v1228, %v1299
        %v1301 = vpop.f32.mrf.mxu0
        %1302 = vdwg.mxu0
        %v1303 = vld [vmem:[%s329] sm:$0x3]
        %v1304 = vld [vmem:[%s329 + $0x2] sm:$0x3]
        %vm1305 = vnez %v1303
        %vm1306 = vnez %v1304
        %v1307 = vsel %vm1305, 16843009, 0
        %v1308 = vsel %vm1306, 16843009, 0
        %v1309 = vunpack.c.0.s8 %v1307
        %v1310 = vunpack.c.0.s8 %v1308
        %vm1311 = vcmp.ne.s32.totalorder %v1309, 0
        %vm1312 = vcmp.ne.s32.totalorder %v1310, 0
        %v1313 = vsel %vm1311, -1e+09, %v848
        %v1314 = vsel %vm1312, -1e+09, %v1300
        %v1315 = vld [vmem:[#allocation3] sm:$0xff]
        %v1316 = vld [vmem:[#allocation3 + $0x8] sm:$0xff]
        %vm1317 = vcmask 64512
        %v1318 = vsel %vm1317, %v1313, -inf
        %1319 = vmax.xlane.f32.xlu0 %v1318
        %v1320 = vpop.xlane.xlu0 %1319
        %v1321 = vsel %vm1317, %v1314, -inf
        %1322 = vmax.xlane.f32.xlu0 %v1321
        %v1323 = vpop.xlane.xlu0 %1322
        %v1324 = vmax.f32 %v1315, %v1320
        %v1325 = vmax.f32 %v1316, %v1323
        %v1326 = vsub.f32 %v1315, %v1324
        %v1327 = vsub.f32 %v1316, %v1325
        %v1328 = vmul.f32 %v1326, 1.442695
        %v1329 = vpow.pop %v1328
        %v1330 = vmul.f32 %v1327, 1.442695
        %v1331 = vpow.pop %v1330
        %1333 = vset.pattern.permute.xlu0 0
        %1334 = vperm.xlu0 %1333, %v1324
        %v1335 = vpop.permute.xlu0 %1334
        %1338 = vset.pattern.permute.xlu0 0
        %1339 = vperm.xlu0 %1338, %v1325
        %v1340 = vpop.permute.xlu0 %1339
        %v1342 = vsub.f32 %v1313, %v1335
        %v1343 = vsub.f32 %v1314, %v1340
        %v1344 = vmul.f32 %v1342, 1.442695
        %v1345 = vpow.pop %v1344
        %v1346 = vmul.f32 %v1343, 1.442695
        %v1347 = vpow.pop %v1346
        %v1348 = vld [vmem:[#allocation4] sm:$0xff]
        %v1349 = vld [vmem:[#allocation4 + $0x8] sm:$0xff]
        %v1350 = vmul.f32 %v1329, %v1348
        %v1351 = vmul.f32 %v1331, %v1349
        %v1352 = vsel %vm1317, %v1345, 0.0
        %1353 = vadd.xlane.f32.xlu0 %v1352
        %v1354 = vpop.xlane.xlu0 %1353
        %v1355 = vsel %vm1317, %v1347, 0.0
        %1356 = vadd.xlane.f32.xlu0 %v1355
        %v1357 = vpop.xlane.xlu0 %1356
        %v1358 = vadd.f32 %v1350, %v1354
        %v1359 = vadd.f32 %v1351, %v1357
        %vm1360 = vcmask 7168
        %1361 = vst.msk [vmem:[#allocation4] sm:$0xff] %vm1360, %v1358
        %1362 = vst.msk [vmem:[#allocation4 + $0x8] sm:$0xff] %vm1360, %v1359
        %v1363 = vld [vmem:[#allocation5] sm:$0xff]
        %v1364 = vld [vmem:[#allocation5 + $0x8] sm:$0xff]
        %1366 = vset.pattern.permute.xlu0 0
        %1367 = vperm.xlu0 %1366, %v1329
        %v1368 = vpop.permute.xlu0 %1367
        %1371 = vset.pattern.permute.xlu0 0
        %1372 = vperm.xlu0 %1371, %v1331
        %v1373 = vpop.permute.xlu0 %1372
        %v1375 = vmul.f32 %v1368, %v1363
        %v1376 = vmul.f32 %v1373, %v1364
        %v1377 = vld [vmem:[%s320] sm:$0xff]
        %v1378 = vld [vmem:[%s320 + $0x8] sm:$0xff]
        %v1380 = vsel %vm1317, %v1345, 0
        %1382 = vmatprep.subr.mxu0 0.0
        %1383 = vmatpush1.msra.mxu0 0.0
        %1384 = vmatprep.subr.mxu0 0.0
        %1385 = vmatpush1.msra.mxu0 0.0
        %1386 = vmatprep.subr.mxu0 0.0
        %1387 = vmatpush1.msra.mxu0 0.0
        %1388 = vmatprep.subr.mxu0 0.0
        %1389 = vmatpush1.msra.mxu0 0.0
        %1390 = vmatprep.subr.mxu0 0.0
        %1391 = vmatpush1.msra.mxu0 0.0
        %1392 = vmatprep.subr.mxu0 0.0
        %1393 = vmatpush1.msra.mxu0 0.0
        %1394 = vmatprep.subr.mxu0 0.0
        %1395 = vmatpush1.msra.mxu0 0.0
        %1396 = vmatprep.subr.mxu0 0.0
        %1397 = vmatpush1.msra.mxu0 0.0
        %1398 = vmatprep.subr.mxu0 0.0
        %1399 = vmatpush1.msra.mxu0 0.0
        %1400 = vmatprep.subr.mxu0 0.0
        %1401 = vmatpush1.msra.mxu0 0.0
        %1402 = vmatprep.subr.mxu0 0.0
        %1403 = vmatpush1.msra.mxu0 0.0
        %1404 = vmatprep.subr.mxu0 0.0
        %1405 = vmatpush1.msra.mxu0 0.0
        %1406 = vmatprep.subr.mxu0 0.0
        %1407 = vmatpush1.msra.mxu0 0.0
        %1408 = vmatprep.subr.mxu0 0.0
        %1409 = vmatpush1.msra.mxu0 0.0
        %1410 = vmatprep.subr.mxu0 0.0
        %1411 = vmatpush1.msra.mxu0 0.0
        %1412 = vmatprep.subr.mxu0 0.0
        %v1413 = vand.u32 %v1377, 4294901760
        %1414 = vmatpush1.msra.mxu0 %v1413
        %1415 = vmatprep.subr.mxu0 0.0
        %1416 = vmatpush2.msra.mxu0 0.0
        %1417 = vmatprep.subr.mxu0 0.0
        %1418 = vmatpush2.msra.mxu0 0.0
        %1419 = vmatprep.subr.mxu0 0.0
        %1420 = vmatpush2.msra.mxu0 0.0
        %1421 = vmatprep.subr.mxu0 0.0
        %1422 = vmatpush2.msra.mxu0 0.0
        %1423 = vmatprep.subr.mxu0 0.0
        %1424 = vmatpush2.msra.mxu0 0.0
        %1425 = vmatprep.subr.mxu0 0.0
        %1426 = vmatpush2.msra.mxu0 0.0
        %1427 = vmatprep.subr.mxu0 0.0
        %1428 = vmatpush2.msra.mxu0 0.0
        %1429 = vmatprep.subr.mxu0 0.0
        %1430 = vmatpush2.msra.mxu0 0.0
        %1431 = vmatprep.subr.mxu0 0.0
        %1432 = vmatpush2.msra.mxu0 0.0
        %1433 = vmatprep.subr.mxu0 0.0
        %1434 = vmatpush2.msra.mxu0 0.0
        %1435 = vmatprep.subr.mxu0 0.0
        %1436 = vmatpush2.msra.mxu0 0.0
        %1437 = vmatprep.subr.mxu0 0.0
        %1438 = vmatpush2.msra.mxu0 0.0
        %1439 = vmatprep.subr.mxu0 0.0
        %1440 = vmatpush2.msra.mxu0 0.0
        %1441 = vmatprep.subr.mxu0 0.0
        %1442 = vmatpush2.msra.mxu0 0.0
        %1443 = vmatprep.subr.mxu0 0.0
        %1444 = vmatpush2.msra.mxu0 0.0
        %1445 = vmatprep.subr.mxu0 0.0
        %1446 = vmatpush2.msra.mxu0 0.0
        %1447 = vmatprep.mubr.f32.mxu0 0.0
        %v1448 = vand.u32 %v1380, 4294901760
        %v1449 = vsub.f32 %v1380, %v1448
        %v1450 = vand.u32 %v1449, 4294901760
        %v1451 = vsub.f32 %v1449, %v1450
        %v1452 = vand.u32 %v1451, 4294901760
        %1453 = vmatmul.mubr.f32.gmra.mxu0 %v1452
        %v1454 = vpop.f32.mrf.mxu0
        %v1455 = vadd.f32 0.0, %v1454
        %v1456 = vpop.f32.mrf.mxu0
        %1457 = vdwg.mxu0
        %1458 = vmatprep.subr.mxu0 0.0
        %1459 = vmatpush1.msra.mxu0 0.0
        %1460 = vmatprep.subr.mxu0 0.0
        %1461 = vmatpush1.msra.mxu0 0.0
        %1462 = vmatprep.subr.mxu0 0.0
        %1463 = vmatpush1.msra.mxu0 0.0
        %1464 = vmatprep.subr.mxu0 0.0
        %1465 = vmatpush1.msra.mxu0 0.0
        %1466 = vmatprep.subr.mxu0 0.0
        %1467 = vmatpush1.msra.mxu0 0.0
        %1468 = vmatprep.subr.mxu0 0.0
        %1469 = vmatpush1.msra.mxu0 0.0
        %1470 = vmatprep.subr.mxu0 0.0
        %1471 = vmatpush1.msra.mxu0 0.0
        %1472 = vmatprep.subr.mxu0 0.0
        %1473 = vmatpush1.msra.mxu0 0.0
        %1474 = vmatprep.subr.mxu0 0.0
        %1475 = vmatpush1.msra.mxu0 0.0
        %1476 = vmatprep.subr.mxu0 0.0
        %1477 = vmatpush1.msra.mxu0 0.0
        %1478 = vmatprep.subr.mxu0 0.0
        %1479 = vmatpush1.msra.mxu0 0.0
        %1480 = vmatprep.subr.mxu0 0.0
        %1481 = vmatpush1.msra.mxu0 0.0
        %1482 = vmatprep.subr.mxu0 0.0
        %1483 = vmatpush1.msra.mxu0 0.0
        %1484 = vmatprep.subr.mxu0 0.0
        %1485 = vmatpush1.msra.mxu0 0.0
        %1486 = vmatprep.subr.mxu0 0.0
        %1487 = vmatpush1.msra.mxu0 0.0
        %1488 = vmatprep.subr.mxu0 0.0
        %v1489 = vand.u32 %v1377, 4294901760
        %v1490 = vsub.f32 %v1377, %v1489
        %v1491 = vand.u32 %v1490, 4294901760
        %v1492 = vsub.f32 %v1490, %v1491
        %v1493 = vand.u32 %v1492, 4294901760
        %1494 = vmatpush1.msra.mxu0 %v1493
        %1495 = vmatprep.subr.mxu0 0.0
        %1496 = vmatpush2.msra.mxu0 0.0
        %1497 = vmatprep.subr.mxu0 0.0
        %1498 = vmatpush2.msra.mxu0 0.0
        %1499 = vmatprep.subr.mxu0 0.0
        %1500 = vmatpush2.msra.mxu0 0.0
        %1501 = vmatprep.subr.mxu0 0.0
        %1502 = vmatpush2.msra.mxu0 0.0
        %1503 = vmatprep.subr.mxu0 0.0
        %1504 = vmatpush2.msra.mxu0 0.0
        %1505 = vmatprep.subr.mxu0 0.0
        %1506 = vmatpush2.msra.mxu0 0.0
        %1507 = vmatprep.subr.mxu0 0.0
        %1508 = vmatpush2.msra.mxu0 0.0
        %1509 = vmatprep.subr.mxu0 0.0
        %1510 = vmatpush2.msra.mxu0 0.0
        %1511 = vmatprep.subr.mxu0 0.0
        %1512 = vmatpush2.msra.mxu0 0.0
        %1513 = vmatprep.subr.mxu0 0.0
        %1514 = vmatpush2.msra.mxu0 0.0
        %1515 = vmatprep.subr.mxu0 0.0
        %1516 = vmatpush2.msra.mxu0 0.0
        %1517 = vmatprep.subr.mxu0 0.0
        %1518 = vmatpush2.msra.mxu0 0.0
        %1519 = vmatprep.subr.mxu0 0.0
        %1520 = vmatpush2.msra.mxu0 0.0
        %1521 = vmatprep.subr.mxu0 0.0
        %1522 = vmatpush2.msra.mxu0 0.0
        %1523 = vmatprep.subr.mxu0 0.0
        %1524 = vmatpush2.msra.mxu0 0.0
        %1525 = vmatprep.subr.mxu0 0.0
        %1526 = vmatpush2.msra.mxu0 0.0
        %1527 = vmatprep.mubr.f32.mxu0 0.0
        %v1528 = vand.u32 %v1380, 4294901760
        %1529 = vmatmul.mubr.f32.gmra.mxu0 %v1528
        %v1530 = vpop.f32.mrf.mxu0
        %v1531 = vadd.f32 %v1455, %v1530
        %v1532 = vpop.f32.mrf.mxu0
        %1533 = vdwg.mxu0
        %1534 = vmatprep.subr.mxu0 0.0
        %1535 = vmatpush1.msra.mxu0 0.0
        %1536 = vmatprep.subr.mxu0 0.0
        %1537 = vmatpush1.msra.mxu0 0.0
        %1538 = vmatprep.subr.mxu0 0.0
        %1539 = vmatpush1.msra.mxu0 0.0
        %1540 = vmatprep.subr.mxu0 0.0
        %1541 = vmatpush1.msra.mxu0 0.0
        %1542 = vmatprep.subr.mxu0 0.0
        %1543 = vmatpush1.msra.mxu0 0.0
        %1544 = vmatprep.subr.mxu0 0.0
        %1545 = vmatpush1.msra.mxu0 0.0
        %1546 = vmatprep.subr.mxu0 0.0
        %1547 = vmatpush1.msra.mxu0 0.0
        %1548 = vmatprep.subr.mxu0 0.0
        %1549 = vmatpush1.msra.mxu0 0.0
        %1550 = vmatprep.subr.mxu0 0.0
        %1551 = vmatpush1.msra.mxu0 0.0
        %1552 = vmatprep.subr.mxu0 0.0
        %1553 = vmatpush1.msra.mxu0 0.0
        %1554 = vmatprep.subr.mxu0 0.0
        %1555 = vmatpush1.msra.mxu0 0.0
        %1556 = vmatprep.subr.mxu0 0.0
        %1557 = vmatpush1.msra.mxu0 0.0
        %1558 = vmatprep.subr.mxu0 0.0
        %1559 = vmatpush1.msra.mxu0 0.0
        %1560 = vmatprep.subr.mxu0 0.0
        %1561 = vmatpush1.msra.mxu0 0.0
        %1562 = vmatprep.subr.mxu0 0.0
        %1563 = vmatpush1.msra.mxu0 0.0
        %1564 = vmatprep.subr.mxu0 0.0
        %v1565 = vand.u32 %v1377, 4294901760
        %v1566 = vsub.f32 %v1377, %v1565
        %1567 = vmatpush1.msra.mxu0 %v1566
        %1568 = vmatprep.subr.mxu0 0.0
        %1569 = vmatpush2.msra.mxu0 0.0
        %1570 = vmatprep.subr.mxu0 0.0
        %1571 = vmatpush2.msra.mxu0 0.0
        %1572 = vmatprep.subr.mxu0 0.0
        %1573 = vmatpush2.msra.mxu0 0.0
        %1574 = vmatprep.subr.mxu0 0.0
        %1575 = vmatpush2.msra.mxu0 0.0
        %1576 = vmatprep.subr.mxu0 0.0
        %1577 = vmatpush2.msra.mxu0 0.0
        %1578 = vmatprep.subr.mxu0 0.0
        %1579 = vmatpush2.msra.mxu0 0.0
        %1580 = vmatprep.subr.mxu0 0.0
        %1581 = vmatpush2.msra.mxu0 0.0
        %1582 = vmatprep.subr.mxu0 0.0
        %1583 = vmatpush2.msra.mxu0 0.0
        %1584 = vmatprep.subr.mxu0 0.0
        %1585 = vmatpush2.msra.mxu0 0.0
        %1586 = vmatprep.subr.mxu0 0.0
        %1587 = vmatpush2.msra.mxu0 0.0
        %1588 = vmatprep.subr.mxu0 0.0
        %1589 = vmatpush2.msra.mxu0 0.0
        %1590 = vmatprep.subr.mxu0 0.0
        %1591 = vmatpush2.msra.mxu0 0.0
        %1592 = vmatprep.subr.mxu0 0.0
        %1593 = vmatpush2.msra.mxu0 0.0
        %1594 = vmatprep.subr.mxu0 0.0
        %1595 = vmatpush2.msra.mxu0 0.0
        %1596 = vmatprep.subr.mxu0 0.0
        %1597 = vmatpush2.msra.mxu0 0.0
        %1598 = vmatprep.subr.mxu0 0.0
        %1599 = vmatpush2.msra.mxu0 0.0
        %1600 = vmatprep.mubr.f32.mxu0 0.0
        %v1601 = vand.u32 %v1380, 4294901760
        %v1602 = vsub.f32 %v1380, %v1601
        %1603 = vmatmul.mubr.f32.gmra.mxu0 %v1602
        %v1604 = vpop.f32.mrf.mxu0
        %v1605 = vadd.f32 %v1531, %v1604
        %v1606 = vpop.f32.mrf.mxu0
        %1607 = vdwg.mxu0
        %1608 = vmatprep.subr.mxu0 0.0
        %1609 = vmatpush1.msra.mxu0 0.0
        %1610 = vmatprep.subr.mxu0 0.0
        %1611 = vmatpush1.msra.mxu0 0.0
        %1612 = vmatprep.subr.mxu0 0.0
        %1613 = vmatpush1.msra.mxu0 0.0
        %1614 = vmatprep.subr.mxu0 0.0
        %1615 = vmatpush1.msra.mxu0 0.0
        %1616 = vmatprep.subr.mxu0 0.0
        %1617 = vmatpush1.msra.mxu0 0.0
        %1618 = vmatprep.subr.mxu0 0.0
        %1619 = vmatpush1.msra.mxu0 0.0
        %1620 = vmatprep.subr.mxu0 0.0
        %1621 = vmatpush1.msra.mxu0 0.0
        %1622 = vmatprep.subr.mxu0 0.0
        %1623 = vmatpush1.msra.mxu0 0.0
        %1624 = vmatprep.subr.mxu0 0.0
        %1625 = vmatpush1.msra.mxu0 0.0
        %1626 = vmatprep.subr.mxu0 0.0
        %1627 = vmatpush1.msra.mxu0 0.0
        %1628 = vmatprep.subr.mxu0 0.0
        %1629 = vmatpush1.msra.mxu0 0.0
        %1630 = vmatprep.subr.mxu0 0.0
        %1631 = vmatpush1.msra.mxu0 0.0
        %1632 = vmatprep.subr.mxu0 0.0
        %1633 = vmatpush1.msra.mxu0 0.0
        %1634 = vmatprep.subr.mxu0 0.0
        %1635 = vmatpush1.msra.mxu0 0.0
        %1636 = vmatprep.subr.mxu0 0.0
        %1637 = vmatpush1.msra.mxu0 0.0
        %1638 = vmatprep.subr.mxu0 0.0
        %v1639 = vand.u32 %v1377, 4294901760
        %1640 = vmatpush1.msra.mxu0 %v1639
        %1641 = vmatprep.subr.mxu0 0.0
        %1642 = vmatpush2.msra.mxu0 0.0
        %1643 = vmatprep.subr.mxu0 0.0
        %1644 = vmatpush2.msra.mxu0 0.0
        %1645 = vmatprep.subr.mxu0 0.0
        %1646 = vmatpush2.msra.mxu0 0.0
        %1647 = vmatprep.subr.mxu0 0.0
        %1648 = vmatpush2.msra.mxu0 0.0
        %1649 = vmatprep.subr.mxu0 0.0
        %1650 = vmatpush2.msra.mxu0 0.0
        %1651 = vmatprep.subr.mxu0 0.0
        %1652 = vmatpush2.msra.mxu0 0.0
        %1653 = vmatprep.subr.mxu0 0.0
        %1654 = vmatpush2.msra.mxu0 0.0
        %1655 = vmatprep.subr.mxu0 0.0
        %1656 = vmatpush2.msra.mxu0 0.0
        %1657 = vmatprep.subr.mxu0 0.0
        %1658 = vmatpush2.msra.mxu0 0.0
        %1659 = vmatprep.subr.mxu0 0.0
        %1660 = vmatpush2.msra.mxu0 0.0
        %1661 = vmatprep.subr.mxu0 0.0
        %1662 = vmatpush2.msra.mxu0 0.0
        %1663 = vmatprep.subr.mxu0 0.0
        %1664 = vmatpush2.msra.mxu0 0.0
        %1665 = vmatprep.subr.mxu0 0.0
        %1666 = vmatpush2.msra.mxu0 0.0
        %1667 = vmatprep.subr.mxu0 0.0
        %1668 = vmatpush2.msra.mxu0 0.0
        %1669 = vmatprep.subr.mxu0 0.0
        %1670 = vmatpush2.msra.mxu0 0.0
        %1671 = vmatprep.subr.mxu0 0.0
        %1672 = vmatpush2.msra.mxu0 0.0
        %1673 = vmatprep.mubr.f32.mxu0 0.0
        %v1674 = vand.u32 %v1380, 4294901760
        %v1675 = vsub.f32 %v1380, %v1674
        %v1676 = vand.u32 %v1675, 4294901760
        %1677 = vmatmul.mubr.f32.gmra.mxu0 %v1676
        %v1678 = vpop.f32.mrf.mxu0
        %v1679 = vadd.f32 %v1605, %v1678
        %v1680 = vpop.f32.mrf.mxu0
        %1681 = vdwg.mxu0
        %1682 = vmatprep.subr.mxu0 0.0
        %1683 = vmatpush1.msra.mxu0 0.0
        %1684 = vmatprep.subr.mxu0 0.0
        %1685 = vmatpush1.msra.mxu0 0.0
        %1686 = vmatprep.subr.mxu0 0.0
        %1687 = vmatpush1.msra.mxu0 0.0
        %1688 = vmatprep.subr.mxu0 0.0
        %1689 = vmatpush1.msra.mxu0 0.0
        %1690 = vmatprep.subr.mxu0 0.0
        %1691 = vmatpush1.msra.mxu0 0.0
        %1692 = vmatprep.subr.mxu0 0.0
        %1693 = vmatpush1.msra.mxu0 0.0
        %1694 = vmatprep.subr.mxu0 0.0
        %1695 = vmatpush1.msra.mxu0 0.0
        %1696 = vmatprep.subr.mxu0 0.0
        %1697 = vmatpush1.msra.mxu0 0.0
        %1698 = vmatprep.subr.mxu0 0.0
        %1699 = vmatpush1.msra.mxu0 0.0
        %1700 = vmatprep.subr.mxu0 0.0
        %1701 = vmatpush1.msra.mxu0 0.0
        %1702 = vmatprep.subr.mxu0 0.0
        %1703 = vmatpush1.msra.mxu0 0.0
        %1704 = vmatprep.subr.mxu0 0.0
        %1705 = vmatpush1.msra.mxu0 0.0
        %1706 = vmatprep.subr.mxu0 0.0
        %1707 = vmatpush1.msra.mxu0 0.0
        %1708 = vmatprep.subr.mxu0 0.0
        %1709 = vmatpush1.msra.mxu0 0.0
        %1710 = vmatprep.subr.mxu0 0.0
        %1711 = vmatpush1.msra.mxu0 0.0
        %1712 = vmatprep.subr.mxu0 0.0
        %v1713 = vand.u32 %v1377, 4294901760
        %v1714 = vsub.f32 %v1377, %v1713
        %v1715 = vand.u32 %v1714, 4294901760
        %1716 = vmatpush1.msra.mxu0 %v1715
        %1717 = vmatprep.subr.mxu0 0.0
        %1718 = vmatpush2.msra.mxu0 0.0
        %1719 = vmatprep.subr.mxu0 0.0
        %1720 = vmatpush2.msra.mxu0 0.0
        %1721 = vmatprep.subr.mxu0 0.0
        %1722 = vmatpush2.msra.mxu0 0.0
        %1723 = vmatprep.subr.mxu0 0.0
        %1724 = vmatpush2.msra.mxu0 0.0
        %1725 = vmatprep.subr.mxu0 0.0
        %1726 = vmatpush2.msra.mxu0 0.0
        %1727 = vmatprep.subr.mxu0 0.0
        %1728 = vmatpush2.msra.mxu0 0.0
        %1729 = vmatprep.subr.mxu0 0.0
        %1730 = vmatpush2.msra.mxu0 0.0
        %1731 = vmatprep.subr.mxu0 0.0
        %1732 = vmatpush2.msra.mxu0 0.0
        %1733 = vmatprep.subr.mxu0 0.0
        %1734 = vmatpush2.msra.mxu0 0.0
        %1735 = vmatprep.subr.mxu0 0.0
        %1736 = vmatpush2.msra.mxu0 0.0
        %1737 = vmatprep.subr.mxu0 0.0
        %1738 = vmatpush2.msra.mxu0 0.0
        %1739 = vmatprep.subr.mxu0 0.0
        %1740 = vmatpush2.msra.mxu0 0.0
        %1741 = vmatprep.subr.mxu0 0.0
        %1742 = vmatpush2.msra.mxu0 0.0
        %1743 = vmatprep.subr.mxu0 0.0
        %1744 = vmatpush2.msra.mxu0 0.0
        %1745 = vmatprep.subr.mxu0 0.0
        %1746 = vmatpush2.msra.mxu0 0.0
        %1747 = vmatprep.subr.mxu0 0.0
        %1748 = vmatpush2.msra.mxu0 0.0
        %1749 = vmatprep.mubr.f32.mxu0 0.0
        %v1750 = vand.u32 %v1380, 4294901760
        %1751 = vmatmul.mubr.f32.gmra.mxu0 %v1750
        %v1752 = vpop.f32.mrf.mxu0
        %v1753 = vadd.f32 %v1679, %v1752
        %v1754 = vpop.f32.mrf.mxu0
        %1755 = vdwg.mxu0
        %1756 = vmatprep.subr.mxu0 0.0
        %1757 = vmatpush1.msra.mxu0 0.0
        %1758 = vmatprep.subr.mxu0 0.0
        %1759 = vmatpush1.msra.mxu0 0.0
        %1760 = vmatprep.subr.mxu0 0.0
        %1761 = vmatpush1.msra.mxu0 0.0
        %1762 = vmatprep.subr.mxu0 0.0
        %1763 = vmatpush1.msra.mxu0 0.0
        %1764 = vmatprep.subr.mxu0 0.0
        %1765 = vmatpush1.msra.mxu0 0.0
        %1766 = vmatprep.subr.mxu0 0.0
        %1767 = vmatpush1.msra.mxu0 0.0
        %1768 = vmatprep.subr.mxu0 0.0
        %1769 = vmatpush1.msra.mxu0 0.0
        %1770 = vmatprep.subr.mxu0 0.0
        %1771 = vmatpush1.msra.mxu0 0.0
        %1772 = vmatprep.subr.mxu0 0.0
        %1773 = vmatpush1.msra.mxu0 0.0
        %1774 = vmatprep.subr.mxu0 0.0
        %1775 = vmatpush1.msra.mxu0 0.0
        %1776 = vmatprep.subr.mxu0 0.0
        %1777 = vmatpush1.msra.mxu0 0.0
        %1778 = vmatprep.subr.mxu0 0.0
        %1779 = vmatpush1.msra.mxu0 0.0
        %1780 = vmatprep.subr.mxu0 0.0
        %1781 = vmatpush1.msra.mxu0 0.0
        %1782 = vmatprep.subr.mxu0 0.0
        %1783 = vmatpush1.msra.mxu0 0.0
        %1784 = vmatprep.subr.mxu0 0.0
        %1785 = vmatpush1.msra.mxu0 0.0
        %1786 = vmatprep.subr.mxu0 0.0
        %v1787 = vand.u32 %v1377, 4294901760
        %1788 = vmatpush1.msra.mxu0 %v1787
        %1789 = vmatprep.subr.mxu0 0.0
        %1790 = vmatpush2.msra.mxu0 0.0
        %1791 = vmatprep.subr.mxu0 0.0
        %1792 = vmatpush2.msra.mxu0 0.0
        %1793 = vmatprep.subr.mxu0 0.0
        %1794 = vmatpush2.msra.mxu0 0.0
        %1795 = vmatprep.subr.mxu0 0.0
        %1796 = vmatpush2.msra.mxu0 0.0
        %1797 = vmatprep.subr.mxu0 0.0
        %1798 = vmatpush2.msra.mxu0 0.0
        %1799 = vmatprep.subr.mxu0 0.0
        %1800 = vmatpush2.msra.mxu0 0.0
        %1801 = vmatprep.subr.mxu0 0.0
        %1802 = vmatpush2.msra.mxu0 0.0
        %1803 = vmatprep.subr.mxu0 0.0
        %1804 = vmatpush2.msra.mxu0 0.0
        %1805 = vmatprep.subr.mxu0 0.0
        %1806 = vmatpush2.msra.mxu0 0.0
        %1807 = vmatprep.subr.mxu0 0.0
        %1808 = vmatpush2.msra.mxu0 0.0
        %1809 = vmatprep.subr.mxu0 0.0
        %1810 = vmatpush2.msra.mxu0 0.0
        %1811 = vmatprep.subr.mxu0 0.0
        %1812 = vmatpush2.msra.mxu0 0.0
        %1813 = vmatprep.subr.mxu0 0.0
        %1814 = vmatpush2.msra.mxu0 0.0
        %1815 = vmatprep.subr.mxu0 0.0
        %1816 = vmatpush2.msra.mxu0 0.0
        %1817 = vmatprep.subr.mxu0 0.0
        %1818 = vmatpush2.msra.mxu0 0.0
        %1819 = vmatprep.subr.mxu0 0.0
        %1820 = vmatpush2.msra.mxu0 0.0
        %1821 = vmatprep.mubr.f32.mxu0 0.0
        %v1822 = vand.u32 %v1380, 4294901760
        %1823 = vmatmul.mubr.f32.gmra.mxu0 %v1822
        %v1824 = vpop.f32.mrf.mxu0
        %v1825 = vadd.f32 %v1753, %v1824
        %v1826 = vpop.f32.mrf.mxu0
        %1827 = vdwg.mxu0
        %v1829 = vsel %vm1317, %v1347, 0
        %1831 = vmatprep.subr.mxu0 0.0
        %1832 = vmatpush1.msra.mxu0 0.0
        %1833 = vmatprep.subr.mxu0 0.0
        %1834 = vmatpush1.msra.mxu0 0.0
        %1835 = vmatprep.subr.mxu0 0.0
        %1836 = vmatpush1.msra.mxu0 0.0
        %1837 = vmatprep.subr.mxu0 0.0
        %1838 = vmatpush1.msra.mxu0 0.0
        %1839 = vmatprep.subr.mxu0 0.0
        %1840 = vmatpush1.msra.mxu0 0.0
        %1841 = vmatprep.subr.mxu0 0.0
        %1842 = vmatpush1.msra.mxu0 0.0
        %1843 = vmatprep.subr.mxu0 0.0
        %1844 = vmatpush1.msra.mxu0 0.0
        %1845 = vmatprep.subr.mxu0 0.0
        %1846 = vmatpush1.msra.mxu0 0.0
        %1847 = vmatprep.subr.mxu0 0.0
        %1848 = vmatpush1.msra.mxu0 0.0
        %1849 = vmatprep.subr.mxu0 0.0
        %1850 = vmatpush1.msra.mxu0 0.0
        %1851 = vmatprep.subr.mxu0 0.0
        %1852 = vmatpush1.msra.mxu0 0.0
        %1853 = vmatprep.subr.mxu0 0.0
        %1854 = vmatpush1.msra.mxu0 0.0
        %1855 = vmatprep.subr.mxu0 0.0
        %1856 = vmatpush1.msra.mxu0 0.0
        %1857 = vmatprep.subr.mxu0 0.0
        %1858 = vmatpush1.msra.mxu0 0.0
        %1859 = vmatprep.subr.mxu0 0.0
        %1860 = vmatpush1.msra.mxu0 0.0
        %1861 = vmatprep.subr.mxu0 0.0
        %v1862 = vand.u32 %v1378, 4294901760
        %1863 = vmatpush1.msra.mxu0 %v1862
        %1864 = vmatprep.subr.mxu0 0.0
        %1865 = vmatpush2.msra.mxu0 0.0
        %1866 = vmatprep.subr.mxu0 0.0
        %1867 = vmatpush2.msra.mxu0 0.0
        %1868 = vmatprep.subr.mxu0 0.0
        %1869 = vmatpush2.msra.mxu0 0.0
        %1870 = vmatprep.subr.mxu0 0.0
        %1871 = vmatpush2.msra.mxu0 0.0
        %1872 = vmatprep.subr.mxu0 0.0
        %1873 = vmatpush2.msra.mxu0 0.0
        %1874 = vmatprep.subr.mxu0 0.0
        %1875 = vmatpush2.msra.mxu0 0.0
        %1876 = vmatprep.subr.mxu0 0.0
        %1877 = vmatpush2.msra.mxu0 0.0
        %1878 = vmatprep.subr.mxu0 0.0
        %1879 = vmatpush2.msra.mxu0 0.0
        %1880 = vmatprep.subr.mxu0 0.0
        %1881 = vmatpush2.msra.mxu0 0.0
        %1882 = vmatprep.subr.mxu0 0.0
        %1883 = vmatpush2.msra.mxu0 0.0
        %1884 = vmatprep.subr.mxu0 0.0
        %1885 = vmatpush2.msra.mxu0 0.0
        %1886 = vmatprep.subr.mxu0 0.0
        %1887 = vmatpush2.msra.mxu0 0.0
        %1888 = vmatprep.subr.mxu0 0.0
        %1889 = vmatpush2.msra.mxu0 0.0
        %1890 = vmatprep.subr.mxu0 0.0
        %1891 = vmatpush2.msra.mxu0 0.0
        %1892 = vmatprep.subr.mxu0 0.0
        %1893 = vmatpush2.msra.mxu0 0.0
        %1894 = vmatprep.subr.mxu0 0.0
        %1895 = vmatpush2.msra.mxu0 0.0
        %1896 = vmatprep.mubr.f32.mxu0 0.0
        %v1897 = vand.u32 %v1829, 4294901760
        %v1898 = vsub.f32 %v1829, %v1897
        %v1899 = vand.u32 %v1898, 4294901760
        %v1900 = vsub.f32 %v1898, %v1899
        %v1901 = vand.u32 %v1900, 4294901760
        %1902 = vmatmul.mubr.f32.gmra.mxu0 %v1901
        %v1903 = vpop.f32.mrf.mxu0
        %v1904 = vadd.f32 0.0, %v1903
        %v1905 = vpop.f32.mrf.mxu0
        %1906 = vdwg.mxu0
        %1907 = vmatprep.subr.mxu0 0.0
        %1908 = vmatpush1.msra.mxu0 0.0
        %1909 = vmatprep.subr.mxu0 0.0
        %1910 = vmatpush1.msra.mxu0 0.0
        %1911 = vmatprep.subr.mxu0 0.0
        %1912 = vmatpush1.msra.mxu0 0.0
        %1913 = vmatprep.subr.mxu0 0.0
        %1914 = vmatpush1.msra.mxu0 0.0
        %1915 = vmatprep.subr.mxu0 0.0
        %1916 = vmatpush1.msra.mxu0 0.0
        %1917 = vmatprep.subr.mxu0 0.0
        %1918 = vmatpush1.msra.mxu0 0.0
        %1919 = vmatprep.subr.mxu0 0.0
        %1920 = vmatpush1.msra.mxu0 0.0
        %1921 = vmatprep.subr.mxu0 0.0
        %1922 = vmatpush1.msra.mxu0 0.0
        %1923 = vmatprep.subr.mxu0 0.0
        %1924 = vmatpush1.msra.mxu0 0.0
        %1925 = vmatprep.subr.mxu0 0.0
        %1926 = vmatpush1.msra.mxu0 0.0
        %1927 = vmatprep.subr.mxu0 0.0
        %1928 = vmatpush1.msra.mxu0 0.0
        %1929 = vmatprep.subr.mxu0 0.0
        %1930 = vmatpush1.msra.mxu0 0.0
        %1931 = vmatprep.subr.mxu0 0.0
        %1932 = vmatpush1.msra.mxu0 0.0
        %1933 = vmatprep.subr.mxu0 0.0
        %1934 = vmatpush1.msra.mxu0 0.0
        %1935 = vmatprep.subr.mxu0 0.0
        %1936 = vmatpush1.msra.mxu0 0.0
        %1937 = vmatprep.subr.mxu0 0.0
        %v1938 = vand.u32 %v1378, 4294901760
        %v1939 = vsub.f32 %v1378, %v1938
        %v1940 = vand.u32 %v1939, 4294901760
        %v1941 = vsub.f32 %v1939, %v1940
        %v1942 = vand.u32 %v1941, 4294901760
        %1943 = vmatpush1.msra.mxu0 %v1942
        %1944 = vmatprep.subr.mxu0 0.0
        %1945 = vmatpush2.msra.mxu0 0.0
        %1946 = vmatprep.subr.mxu0 0.0
        %1947 = vmatpush2.msra.mxu0 0.0
        %1948 = vmatprep.subr.mxu0 0.0
        %1949 = vmatpush2.msra.mxu0 0.0
        %1950 = vmatprep.subr.mxu0 0.0
        %1951 = vmatpush2.msra.mxu0 0.0
        %1952 = vmatprep.subr.mxu0 0.0
        %1953 = vmatpush2.msra.mxu0 0.0
        %1954 = vmatprep.subr.mxu0 0.0
        %1955 = vmatpush2.msra.mxu0 0.0
        %1956 = vmatprep.subr.mxu0 0.0
        %1957 = vmatpush2.msra.mxu0 0.0
        %1958 = vmatprep.subr.mxu0 0.0
        %1959 = vmatpush2.msra.mxu0 0.0
        %1960 = vmatprep.subr.mxu0 0.0
        %1961 = vmatpush2.msra.mxu0 0.0
        %1962 = vmatprep.subr.mxu0 0.0
        %1963 = vmatpush2.msra.mxu0 0.0
        %1964 = vmatprep.subr.mxu0 0.0
        %1965 = vmatpush2.msra.mxu0 0.0
        %1966 = vmatprep.subr.mxu0 0.0
        %1967 = vmatpush2.msra.mxu0 0.0
        %1968 = vmatprep.subr.mxu0 0.0
        %1969 = vmatpush2.msra.mxu0 0.0
        %1970 = vmatprep.subr.mxu0 0.0
        %1971 = vmatpush2.msra.mxu0 0.0
        %1972 = vmatprep.subr.mxu0 0.0
        %1973 = vmatpush2.msra.mxu0 0.0
        %1974 = vmatprep.subr.mxu0 0.0
        %1975 = vmatpush2.msra.mxu0 0.0
        %1976 = vmatprep.mubr.f32.mxu0 0.0
        %v1977 = vand.u32 %v1829, 4294901760
        %1978 = vmatmul.mubr.f32.gmra.mxu0 %v1977
        %v1979 = vpop.f32.mrf.mxu0
        %v1980 = vadd.f32 %v1904, %v1979
        %v1981 = vpop.f32.mrf.mxu0
        %1982 = vdwg.mxu0
        %1983 = vmatprep.subr.mxu0 0.0
        %1984 = vmatpush1.msra.mxu0 0.0
        %1985 = vmatprep.subr.mxu0 0.0
        %1986 = vmatpush1.msra.mxu0 0.0
        %1987 = vmatprep.subr.mxu0 0.0
        %1988 = vmatpush1.msra.mxu0 0.0
        %1989 = vmatprep.subr.mxu0 0.0
        %1990 = vmatpush1.msra.mxu0 0.0
        %1991 = vmatprep.subr.mxu0 0.0
        %1992 = vmatpush1.msra.mxu0 0.0
        %1993 = vmatprep.subr.mxu0 0.0
        %1994 = vmatpush1.msra.mxu0 0.0
        %1995 = vmatprep.subr.mxu0 0.0
        %1996 = vmatpush1.msra.mxu0 0.0
        %1997 = vmatprep.subr.mxu0 0.0
        %1998 = vmatpush1.msra.mxu0 0.0
        %1999 = vmatprep.subr.mxu0 0.0
        %2000 = vmatpush1.msra.mxu0 0.0
        %2001 = vmatprep.subr.mxu0 0.0
        %2002 = vmatpush1.msra.mxu0 0.0
        %2003 = vmatprep.subr.mxu0 0.0
        %2004 = vmatpush1.msra.mxu0 0.0
        %2005 = vmatprep.subr.mxu0 0.0
        %2006 = vmatpush1.msra.mxu0 0.0
        %2007 = vmatprep.subr.mxu0 0.0
        %2008 = vmatpush1.msra.mxu0 0.0
        %2009 = vmatprep.subr.mxu0 0.0
        %2010 = vmatpush1.msra.mxu0 0.0
        %2011 = vmatprep.subr.mxu0 0.0
        %2012 = vmatpush1.msra.mxu0 0.0
        %2013 = vmatprep.subr.mxu0 0.0
        %v2014 = vand.u32 %v1378, 4294901760
        %v2015 = vsub.f32 %v1378, %v2014
        %2016 = vmatpush1.msra.mxu0 %v2015
        %2017 = vmatprep.subr.mxu0 0.0
        %2018 = vmatpush2.msra.mxu0 0.0
        %2019 = vmatprep.subr.mxu0 0.0
        %2020 = vmatpush2.msra.mxu0 0.0
        %2021 = vmatprep.subr.mxu0 0.0
        %2022 = vmatpush2.msra.mxu0 0.0
        %2023 = vmatprep.subr.mxu0 0.0
        %2024 = vmatpush2.msra.mxu0 0.0
        %2025 = vmatprep.subr.mxu0 0.0
        %2026 = vmatpush2.msra.mxu0 0.0
        %2027 = vmatprep.subr.mxu0 0.0
        %2028 = vmatpush2.msra.mxu0 0.0
        %2029 = vmatprep.subr.mxu0 0.0
        %2030 = vmatpush2.msra.mxu0 0.0
        %2031 = vmatprep.subr.mxu0 0.0
        %2032 = vmatpush2.msra.mxu0 0.0
        %2033 = vmatprep.subr.mxu0 0.0
        %2034 = vmatpush2.msra.mxu0 0.0
        %2035 = vmatprep.subr.mxu0 0.0
        %2036 = vmatpush2.msra.mxu0 0.0
        %2037 = vmatprep.subr.mxu0 0.0
        %2038 = vmatpush2.msra.mxu0 0.0
        %2039 = vmatprep.subr.mxu0 0.0
        %2040 = vmatpush2.msra.mxu0 0.0
        %2041 = vmatprep.subr.mxu0 0.0
        %2042 = vmatpush2.msra.mxu0 0.0
        %2043 = vmatprep.subr.mxu0 0.0
        %2044 = vmatpush2.msra.mxu0 0.0
        %2045 = vmatprep.subr.mxu0 0.0
        %2046 = vmatpush2.msra.mxu0 0.0
        %2047 = vmatprep.subr.mxu0 0.0
        %2048 = vmatpush2.msra.mxu0 0.0
        %2049 = vmatprep.mubr.f32.mxu0 0.0
        %v2050 = vand.u32 %v1829, 4294901760
        %v2051 = vsub.f32 %v1829, %v2050
        %2052 = vmatmul.mubr.f32.gmra.mxu0 %v2051
        %v2053 = vpop.f32.mrf.mxu0
        %v2054 = vadd.f32 %v1980, %v2053
        %v2055 = vpop.f32.mrf.mxu0
        %2056 = vdwg.mxu0
        %2057 = vmatprep.subr.mxu0 0.0
        %2058 = vmatpush1.msra.mxu0 0.0
        %2059 = vmatprep.subr.mxu0 0.0
        %2060 = vmatpush1.msra.mxu0 0.0
        %2061 = vmatprep.subr.mxu0 0.0
        %2062 = vmatpush1.msra.mxu0 0.0
        %2063 = vmatprep.subr.mxu0 0.0
        %2064 = vmatpush1.msra.mxu0 0.0
        %2065 = vmatprep.subr.mxu0 0.0
        %2066 = vmatpush1.msra.mxu0 0.0
        %2067 = vmatprep.subr.mxu0 0.0
        %2068 = vmatpush1.msra.mxu0 0.0
        %2069 = vmatprep.subr.mxu0 0.0
        %2070 = vmatpush1.msra.mxu0 0.0
        %2071 = vmatprep.subr.mxu0 0.0
        %2072 = vmatpush1.msra.mxu0 0.0
        %2073 = vmatprep.subr.mxu0 0.0
        %2074 = vmatpush1.msra.mxu0 0.0
        %2075 = vmatprep.subr.mxu0 0.0
        %2076 = vmatpush1.msra.mxu0 0.0
        %2077 = vmatprep.subr.mxu0 0.0
        %2078 = vmatpush1.msra.mxu0 0.0
        %2079 = vmatprep.subr.mxu0 0.0
        %2080 = vmatpush1.msra.mxu0 0.0
        %2081 = vmatprep.subr.mxu0 0.0
        %2082 = vmatpush1.msra.mxu0 0.0
        %2083 = vmatprep.subr.mxu0 0.0
        %2084 = vmatpush1.msra.mxu0 0.0
        %2085 = vmatprep.subr.mxu0 0.0
        %2086 = vmatpush1.msra.mxu0 0.0
        %2087 = vmatprep.subr.mxu0 0.0
        %v2088 = vand.u32 %v1378, 4294901760
        %2089 = vmatpush1.msra.mxu0 %v2088
        %2090 = vmatprep.subr.mxu0 0.0
        %2091 = vmatpush2.msra.mxu0 0.0
        %2092 = vmatprep.subr.mxu0 0.0
        %2093 = vmatpush2.msra.mxu0 0.0
        %2094 = vmatprep.subr.mxu0 0.0
        %2095 = vmatpush2.msra.mxu0 0.0
        %2096 = vmatprep.subr.mxu0 0.0
        %2097 = vmatpush2.msra.mxu0 0.0
        %2098 = vmatprep.subr.mxu0 0.0
        %2099 = vmatpush2.msra.mxu0 0.0
        %2100 = vmatprep.subr.mxu0 0.0
        %2101 = vmatpush2.msra.mxu0 0.0
        %2102 = vmatprep.subr.mxu0 0.0
        %2103 = vmatpush2.msra.mxu0 0.0
        %2104 = vmatprep.subr.mxu0 0.0
        %2105 = vmatpush2.msra.mxu0 0.0
        %2106 = vmatprep.subr.mxu0 0.0
        %2107 = vmatpush2.msra.mxu0 0.0
        %2108 = vmatprep.subr.mxu0 0.0
        %2109 = vmatpush2.msra.mxu0 0.0
        %2110 = vmatprep.subr.mxu0 0.0
        %2111 = vmatpush2.msra.mxu0 0.0
        %2112 = vmatprep.subr.mxu0 0.0
        %2113 = vmatpush2.msra.mxu0 0.0
        %2114 = vmatprep.subr.mxu0 0.0
        %2115 = vmatpush2.msra.mxu0 0.0
        %2116 = vmatprep.subr.mxu0 0.0
        %2117 = vmatpush2.msra.mxu0 0.0
        %2118 = vmatprep.subr.mxu0 0.0
        %2119 = vmatpush2.msra.mxu0 0.0
        %2120 = vmatprep.subr.mxu0 0.0
        %2121 = vmatpush2.msra.mxu0 0.0
        %2122 = vmatprep.mubr.f32.mxu0 0.0
        %v2123 = vand.u32 %v1829, 4294901760
        %v2124 = vsub.f32 %v1829, %v2123
        %v2125 = vand.u32 %v2124, 4294901760
        %2126 = vmatmul.mubr.f32.gmra.mxu0 %v2125
        %v2127 = vpop.f32.mrf.mxu0
        %v2128 = vadd.f32 %v2054, %v2127
        %v2129 = vpop.f32.mrf.mxu0
        %2130 = vdwg.mxu0
        %2131 = vmatprep.subr.mxu0 0.0
        %2132 = vmatpush1.msra.mxu0 0.0
        %2133 = vmatprep.subr.mxu0 0.0
        %2134 = vmatpush1.msra.mxu0 0.0
        %2135 = vmatprep.subr.mxu0 0.0
        %2136 = vmatpush1.msra.mxu0 0.0
        %2137 = vmatprep.subr.mxu0 0.0
        %2138 = vmatpush1.msra.mxu0 0.0
        %2139 = vmatprep.subr.mxu0 0.0
        %2140 = vmatpush1.msra.mxu0 0.0
        %2141 = vmatprep.subr.mxu0 0.0
        %2142 = vmatpush1.msra.mxu0 0.0
        %2143 = vmatprep.subr.mxu0 0.0
        %2144 = vmatpush1.msra.mxu0 0.0
        %2145 = vmatprep.subr.mxu0 0.0
        %2146 = vmatpush1.msra.mxu0 0.0
        %2147 = vmatprep.subr.mxu0 0.0
        %2148 = vmatpush1.msra.mxu0 0.0
        %2149 = vmatprep.subr.mxu0 0.0
        %2150 = vmatpush1.msra.mxu0 0.0
        %2151 = vmatprep.subr.mxu0 0.0
        %2152 = vmatpush1.msra.mxu0 0.0
        %2153 = vmatprep.subr.mxu0 0.0
        %2154 = vmatpush1.msra.mxu0 0.0
        %2155 = vmatprep.subr.mxu0 0.0
        %2156 = vmatpush1.msra.mxu0 0.0
        %2157 = vmatprep.subr.mxu0 0.0
        %2158 = vmatpush1.msra.mxu0 0.0
        %2159 = vmatprep.subr.mxu0 0.0
        %2160 = vmatpush1.msra.mxu0 0.0
        %2161 = vmatprep.subr.mxu0 0.0
        %v2162 = vand.u32 %v1378, 4294901760
        %v2163 = vsub.f32 %v1378, %v2162
        %v2164 = vand.u32 %v2163, 4294901760
        %2165 = vmatpush1.msra.mxu0 %v2164
        %2166 = vmatprep.subr.mxu0 0.0
        %2167 = vmatpush2.msra.mxu0 0.0
        %2168 = vmatprep.subr.mxu0 0.0
        %2169 = vmatpush2.msra.mxu0 0.0
        %2170 = vmatprep.subr.mxu0 0.0
        %2171 = vmatpush2.msra.mxu0 0.0
        %2172 = vmatprep.subr.mxu0 0.0
        %2173 = vmatpush2.msra.mxu0 0.0
        %2174 = vmatprep.subr.mxu0 0.0
        %2175 = vmatpush2.msra.mxu0 0.0
        %2176 = vmatprep.subr.mxu0 0.0
        %2177 = vmatpush2.msra.mxu0 0.0
        %2178 = vmatprep.subr.mxu0 0.0
        %2179 = vmatpush2.msra.mxu0 0.0
        %2180 = vmatprep.subr.mxu0 0.0
        %2181 = vmatpush2.msra.mxu0 0.0
        %2182 = vmatprep.subr.mxu0 0.0
        %2183 = vmatpush2.msra.mxu0 0.0
        %2184 = vmatprep.subr.mxu0 0.0
        %2185 = vmatpush2.msra.mxu0 0.0
        %2186 = vmatprep.subr.mxu0 0.0
        %2187 = vmatpush2.msra.mxu0 0.0
        %2188 = vmatprep.subr.mxu0 0.0
        %2189 = vmatpush2.msra.mxu0 0.0
        %2190 = vmatprep.subr.mxu0 0.0
        %2191 = vmatpush2.msra.mxu0 0.0
        %2192 = vmatprep.subr.mxu0 0.0
        %2193 = vmatpush2.msra.mxu0 0.0
        %2194 = vmatprep.subr.mxu0 0.0
        %2195 = vmatpush2.msra.mxu0 0.0
        %2196 = vmatprep.subr.mxu0 0.0
        %2197 = vmatpush2.msra.mxu0 0.0
        %2198 = vmatprep.mubr.f32.mxu0 0.0
        %v2199 = vand.u32 %v1829, 4294901760
        %2200 = vmatmul.mubr.f32.gmra.mxu0 %v2199
        %v2201 = vpop.f32.mrf.mxu0
        %v2202 = vadd.f32 %v2128, %v2201
        %v2203 = vpop.f32.mrf.mxu0
        %2204 = vdwg.mxu0
        %2205 = vmatprep.subr.mxu0 0.0
        %2206 = vmatpush1.msra.mxu0 0.0
        %2207 = vmatprep.subr.mxu0 0.0
        %2208 = vmatpush1.msra.mxu0 0.0
        %2209 = vmatprep.subr.mxu0 0.0
        %2210 = vmatpush1.msra.mxu0 0.0
        %2211 = vmatprep.subr.mxu0 0.0
        %2212 = vmatpush1.msra.mxu0 0.0
        %2213 = vmatprep.subr.mxu0 0.0
        %2214 = vmatpush1.msra.mxu0 0.0
        %2215 = vmatprep.subr.mxu0 0.0
        %2216 = vmatpush1.msra.mxu0 0.0
        %2217 = vmatprep.subr.mxu0 0.0
        %2218 = vmatpush1.msra.mxu0 0.0
        %2219 = vmatprep.subr.mxu0 0.0
        %2220 = vmatpush1.msra.mxu0 0.0
        %2221 = vmatprep.subr.mxu0 0.0
        %2222 = vmatpush1.msra.mxu0 0.0
        %2223 = vmatprep.subr.mxu0 0.0
        %2224 = vmatpush1.msra.mxu0 0.0
        %2225 = vmatprep.subr.mxu0 0.0
        %2226 = vmatpush1.msra.mxu0 0.0
        %2227 = vmatprep.subr.mxu0 0.0
        %2228 = vmatpush1.msra.mxu0 0.0
        %2229 = vmatprep.subr.mxu0 0.0
        %2230 = vmatpush1.msra.mxu0 0.0
        %2231 = vmatprep.subr.mxu0 0.0
        %2232 = vmatpush1.msra.mxu0 0.0
        %2233 = vmatprep.subr.mxu0 0.0
        %2234 = vmatpush1.msra.mxu0 0.0
        %2235 = vmatprep.subr.mxu0 0.0
        %v2236 = vand.u32 %v1378, 4294901760
        %2237 = vmatpush1.msra.mxu0 %v2236
        %2238 = vmatprep.subr.mxu0 0.0
        %2239 = vmatpush2.msra.mxu0 0.0
        %2240 = vmatprep.subr.mxu0 0.0
        %2241 = vmatpush2.msra.mxu0 0.0
        %2242 = vmatprep.subr.mxu0 0.0
        %2243 = vmatpush2.msra.mxu0 0.0
        %2244 = vmatprep.subr.mxu0 0.0
        %2245 = vmatpush2.msra.mxu0 0.0
        %2246 = vmatprep.subr.mxu0 0.0
        %2247 = vmatpush2.msra.mxu0 0.0
        %2248 = vmatprep.subr.mxu0 0.0
        %2249 = vmatpush2.msra.mxu0 0.0
        %2250 = vmatprep.subr.mxu0 0.0
        %2251 = vmatpush2.msra.mxu0 0.0
        %2252 = vmatprep.subr.mxu0 0.0
        %2253 = vmatpush2.msra.mxu0 0.0
        %2254 = vmatprep.subr.mxu0 0.0
        %2255 = vmatpush2.msra.mxu0 0.0
        %2256 = vmatprep.subr.mxu0 0.0
        %2257 = vmatpush2.msra.mxu0 0.0
        %2258 = vmatprep.subr.mxu0 0.0
        %2259 = vmatpush2.msra.mxu0 0.0
        %2260 = vmatprep.subr.mxu0 0.0
        %2261 = vmatpush2.msra.mxu0 0.0
        %2262 = vmatprep.subr.mxu0 0.0
        %2263 = vmatpush2.msra.mxu0 0.0
        %2264 = vmatprep.subr.mxu0 0.0
        %2265 = vmatpush2.msra.mxu0 0.0
        %2266 = vmatprep.subr.mxu0 0.0
        %2267 = vmatpush2.msra.mxu0 0.0
        %2268 = vmatprep.subr.mxu0 0.0
        %2269 = vmatpush2.msra.mxu0 0.0
        %2270 = vmatprep.mubr.f32.mxu0 0.0
        %v2271 = vand.u32 %v1829, 4294901760
        %2272 = vmatmul.mubr.f32.gmra.mxu0 %v2271
        %v2273 = vpop.f32.mrf.mxu0
        %v2274 = vadd.f32 %v2202, %v2273
        %v2275 = vpop.f32.mrf.mxu0
        %2276 = vdwg.mxu0
        %v2277 = vadd.f32 %v1375, %v1825
        %v2278 = vadd.f32 %v1376, %v2274
        %2279 = vst.msk [vmem:[#allocation5] sm:$0xff] %vm398, %v2277
        %2280 = vst.msk [vmem:[#allocation5 + $0x8] sm:$0xff] %vm398, %v2278
        %2281 = vst.msk [vmem:[#allocation3] sm:$0xff] %vm1360, %v1324
        %2282 = vst.msk [vmem:[#allocation3 + $0x8] sm:$0xff] %vm1360, %v1325
        // Predicated region
        $region57: #{tpu_custom_call.1} parent=35 // pred_check
          %p2283 = pneg %p376
        $region58: #{tpu_custom_call.1} parent=35 // pred_check_branch
          %2285 = sbr.rel (%p2283) target = $region60
        $region59: #{tpu_custom_call.1} parent=35 // pred_region
          %v2286 = vld [vmem:[#allocation5] sm:$0xff]
          %v2287 = vld [vmem:[#allocation5 + $0x8] sm:$0xff]
          %v2288 = vld [vmem:[#allocation4] sm:$0xff]
          %v2289 = vld [vmem:[#allocation4 + $0x8] sm:$0xff]
          %2291 = vset.pattern.permute.xlu0 0
          %2292 = vperm.xlu0 %2291, %v2288
          %v2293 = vpop.permute.xlu0 %2292
          %2296 = vset.pattern.permute.xlu0 0
          %2297 = vperm.xlu0 %2296, %v2289
          %v2298 = vpop.permute.xlu0 %2297
          %v2300 = vrcp.pop %v2293
          %v2301 = vmul.f32 %v2286, %v2300
          %v2302 = vrcp.pop %v2298
          %v2303 = vmul.f32 %v2287, %v2302
          %2304 = vst.msk [vmem:[%s368] sm:$0xff] %vm398, %v2301
          %2305 = vst.msk [vmem:[%s368 + $0x8] sm:$0xff] %vm398, %v2303
        $region60: #{tpu_custom_call.1} parent=35 // pred_fallthru
          _
        %s2306 = sand.u32 %s170, 1
        %s2307 = scalar_lea.sflag [#allocation8], %s2306
        %s2308 = sand.u32 %s170, 1
        %s2309 = smul.addr %s2308, 16
        %s2310 = scalar_lea.vmem [#allocation14], %s2309
        // Predicated region
        $region61: #{tpu_custom_call.1} parent=35 // pred_check
          %p2311 = pneg %p180
        $region62: #{tpu_custom_call.1} parent=35 // pred_check_branch
          %2313 = sbr.rel (%p2311) target = $region64
        $region63: #{tpu_custom_call.1} parent=35 // pred_region
          %s2314 = smul.u32 2, %s32
          %s2316 = ssub.s32 256, 256
          %2317 = vsyncadd %s2307, %s2316
          %s2318 = sadd.s32 %s33, %s2314
          %s2319 = smul.addr %s2318, 128
          %s2320 = scalar_lea.hbm %s4, %s2319
          %s2321 = sshll.u32 %s2310, 4
          %s2322 = int_to_ptr.vmem [resolvable:$true] %s2321
          %2327 = dma.vmem_to_hbm [thread:$0]  %s2322, 256, %s2320, %s2307, 128, 128, 8
        $region64: #{tpu_custom_call.1} parent=35 // pred_fallthru
          _
      $region36: #{tpu_custom_call.1} parent=5 // pred_fallthru
        _
      %p2328 = scmp.le.s32.totalorder 2, %s22
      // Predicated region
      $region65: #{tpu_custom_call.1} parent=5 // pred_check
        %p2329 = pneg %p2328
      $region66: #{tpu_custom_call.1} parent=5 // pred_check_branch
        %2331 = sbr.rel (%p2329) target = $region68
      $region67: #{tpu_custom_call.1} parent=5 // pred_region
        %s2332 = ssub.s32 %s22, 2
        // Predicated region
        $region69: #{tpu_custom_call.1} parent=67 // pred_check
          %p2333 = pneg %p186
        $region70: #{tpu_custom_call.1} parent=67 // pred_check_branch
          %2335 = sbr.rel (%p2333) target = $region72
        $region71: #{tpu_custom_call.1} parent=67 // pred_region
          %s2336 = sand.u32 %s171, 1
          %s2337 = scalar_lea.sflag [#allocation8], %s2336
          %s2338 = sand.u32 %s171, 1
          %s2339 = smul.addr %s2338, 16
          %s2340 = scalar_lea.vmem [#allocation14], %s2339
          %2341 = dma.done %s2337, 256
        $region72: #{tpu_custom_call.1} parent=67 // pred_fallthru
          _
      $region68: #{tpu_custom_call.1} parent=5 // pred_fallthru
        _
    $region6: #{tpu_custom_call.1} parent=1 // loop_footer
      %s26 = sadd.s32 1, %s22
    $region7: #{tpu_custom_call.1} parent=1 // loop_footer_branch
      %21 = sbr.rel target = $region3
    $region8: #{tpu_custom_call.1} parent=1 // loop_exit
      _
    %2342 = vsyncpa [#allocation7], 1
    %s2343 = scalar_lea.sflag [#allocation7], 1
    %2344 = vsyncpa %s2343, 1
    %2345 = vsyncpa [#allocation10], 1
    %s2346 = scalar_lea.sflag [#allocation10], 1
    %2347 = vsyncpa %s2346, 1
    %2348 = vsyncpa [#allocation13], 1
    %s2349 = scalar_lea.sflag [#allocation13], 1
    %2350 = vsyncpa %s2349, 1
    %2351 = vsyncpa [#allocation8], 1
    %s2352 = scalar_lea.sflag [#allocation8], 1
    %2353 = vsyncpa %s2352, 1

</llo_original>
